<compile_context>
chip_gen: v7x
topology: tpu7x:2x2x1
jax: 0.10.0
libtpu: 0.0.40
codegen_flags: <defaults>
</compile_context>

<pallas_src>
import math
import functools

import jax
import jax.numpy as jnp
from jax import lax
from jax.experimental import pallas as pl
from jax.experimental.pallas import tpu as pltpu

BN_EPS = 1e-5


def _sigmoid(x):
    return 1.0 / (1.0 + jnp.exp(-x))


def _small_matmul_vpu(x, w):
    """(R, Cin) @ (Cin, Cout) for tiny R (the per-image ca GEMV): VPU
    broadcast-multiply + reduction instead of a 1..bt-row MXU matmul."""
    return jnp.sum(x[:, :, None] * w[None, :, :], axis=1)


def _shift2d(x, dy, dx):
    """out[b, y, xw] = x[b, y+dy, xw+dx] with zero padding (static dy/dx)."""
    bt, H, W, C = x.shape
    if dy > 0:
        x = jnp.concatenate([x[:, dy:], jnp.zeros((bt, dy, W, C), x.dtype)], axis=1)
    elif dy < 0:
        x = jnp.concatenate([jnp.zeros((bt, -dy, W, C), x.dtype), x[:, :dy]], axis=1)
    if dx > 0:
        x = jnp.concatenate([x[:, :, dx:], jnp.zeros((bt, H, dx, C), x.dtype)], axis=2)
    elif dx < 0:
        x = jnp.concatenate([jnp.zeros((bt, H, -dx, C), x.dtype), x[:, :, :dx]], axis=2)
    return x


def dfim_kernel(xh_ref, xl_ref,
                wp_ref, bp_ref,
                wa1_ref, ba1_ref, wa2_ref, ba2_ref,
                wc1_ref, bc1_ref, wc2_ref, bc2_ref,
                we_ref, be_ref,
                out_ref, *, H, W):
    bt, Ch, HW = xh_ref.shape
    Cl = xl_ref.shape[1]
    Co = out_ref.shape[1]
    M = bt * HW

    # NCHW-style blocks -> (M, C) activations (batch folded into the M dim).
    xh_f = jnp.transpose(xh_ref[...].astype(jnp.float32), (0, 2, 1)).reshape(M, Ch)
    xl_f = jnp.transpose(xl_ref[...].astype(jnp.float32), (0, 2, 1)).reshape(M, Cl)
    xh_b = xh_f.astype(jnp.bfloat16)
    xl_b = xl_f.astype(jnp.bfloat16)

    # plus_conv: 1x1 DO-conv (+ folded BN) + ReLU on x_high.           (MXU, bf16)
    plus = jnp.maximum(
        jnp.dot(xh_b, wp_ref[...], preferred_element_type=jnp.float32) + bp_ref[...],
        0.0)

    # pa branch on x_low: 1x1 -> BN -> ReLU -> 1x1 -> BN -> Sigmoid.   (MXU, bf16)
    t = jnp.maximum(
        jnp.dot(xl_b, wa1_ref[...], preferred_element_type=jnp.float32) + ba1_ref[...],
        0.0)
    pa = _sigmoid(
        jnp.dot(t.astype(jnp.bfloat16), wa2_ref[...],
                preferred_element_type=jnp.float32) + ba2_ref[...])

    # ca branch: per-image GAP -> 1x1 -> ReLU -> 1x1 -> Sigmoid.       (VPU, f32)
    pooled = plus.reshape(bt, HW, Cl).sum(axis=1) * (1.0 / HW)          # (bt, Cl)
    t2 = jnp.maximum(_small_matmul_vpu(pooled, wc1_ref[...]) + bc1_ref[...], 0.0)
    ca = _sigmoid(_small_matmul_vpu(t2, wc2_ref[...]) + bc2_ref[...])   # (bt, Cl)

    # feat = x_low + plus_conv(x_high)
    feat = (xl_f + plus).reshape(bt, H, W, Cl)

    # end_conv: 3x3, stride 1, pad 1 — im2col: concat the 9 shifted windows on
    # the channel axis and run ONE (M, 9*Cl) x (9*Cl, Co) matmul.      (MXU, bf16)
    taps = [_shift2d(feat, ky - 1, kx - 1) for ky in range(3) for kx in range(3)]
    patches = jnp.concatenate(taps, axis=-1).reshape(M, 9 * Cl).astype(jnp.bfloat16)
    end = jnp.maximum(
        jnp.dot(patches, we_ref[...], preferred_element_type=jnp.float32) + be_ref[...],
        0.0)                                                            # (M, Co)

    # Gate: end * ca * pa  (ca broadcast per image over its H*W pixels).
    ca_b = jnp.broadcast_to(ca[:, None, :], (bt, HW, Cl)).reshape(M, Cl)
    gated = end * ca_b * pa                                             # (M, Co)

    # Lane-dense store: (Co, M) puts M = bt*H*W (>=128) on the 128-lane axis.
    out_ref[0] = jnp.transpose(gated, (1, 0)).astype(out_ref.dtype)


def doconv_folded(key, cin, cout, kh, kw):
    """Build DOConv2d weights exactly per the PyTorch __init__ and fold the
    subsequent eval-mode BatchNorm2d (gamma=1, beta=0, mean=0, var=1)."""
    # TODO(synk): BatchNorm is implemented in inference mode (running stats),
    # not training-mode batch statistics as PyTorch would use during .train().
    Dm = kh * kw
    fan_in = cin * Dm
    a = math.sqrt(5.0)
    gain = math.sqrt(2.0 / (1.0 + a * a))
    wbound = gain * math.sqrt(3.0 / fan_in)           # kaiming_uniform_(a=sqrt(5))
    kW, kb = jax.random.split(key)
    Wparam = jax.random.uniform(kW, (cout, cin, Dm), jnp.float32, -wbound, wbound)
    bbound = 1.0 / math.sqrt(fan_in)
    bias = jax.random.uniform(kb, (cout,), jnp.float32, -bbound, bbound)

    if Dm > 1:
        D = jnp.zeros((cin, Dm, Dm), jnp.float32)                       # init_zero
        d_diag = jnp.tile(jnp.eye(Dm, dtype=jnp.float32)[None], (cin, 1, 1))
        DoW = jnp.einsum('ims,ois->oim', D + d_diag, Wparam).reshape(cout, cin, kh, kw)
    else:
        DoW = Wparam.reshape(cout, cin, kh, kw)

    # Fold eval-mode BN into conv weight/bias.
    scale = 1.0 / jnp.sqrt(jnp.ones((cout,), jnp.float32) + BN_EPS)
    W_f = DoW * scale[:, None, None, None]
    b_f = bias * scale
    return W_f, b_f


def dfim_forward(x_high, x_low, params):
    """x_high: (B, planes_high, H, W); x_low: (B, planes_low, H, W) (NCHW, f32)."""
    B, Ch, H, W = x_high.shape
    Cl = x_low.shape[1]
    (Wp, bp), (Wa1, ba1), (Wa2, ba2), (Wc1, bc1), (Wc2, bc2), (We, be) = params
    Co = We.shape[0]
    assert Co == Cl, "DFIM gating (end * ca * pa) requires planes_out == planes_low"
    assert x_low.shape[0] == B and x_low.shape[2:] == (H, W)

    HW = H * W
    # Fold enough batch elements into one grid step that M = bt*HW fills the
    # MXU row dimension (target >= 128 rows); grid iterates over batch groups.
    target = max(1, -(-128 // HW))
    bt = 1
    for d in range(min(B, target), 0, -1):
        if B % d == 0:
            bt = d
            break
    G = B // bt
    M = bt * HW

    # Activations stay in NCHW memory order; (B,C,H,W) -> (B,C,H*W) is a free
    # reshape, so the wrapper does no NHWC<->NCHW activation transposes.
    xh = x_high.reshape(B, Ch, HW).astype(jnp.bfloat16)
    xl = x_low.reshape(B, Cl, HW).astype(jnp.bfloat16)

    def p1x1(Wf):                    # (cout, cin, 1, 1) -> (cin, cout)
        return jnp.transpose(Wf[:, :, 0, 0], (1, 0))

    def b2(b):
        return b.reshape(1, -1).astype(jnp.float32)

    bf16 = jnp.bfloat16
    weight_args = [
        p1x1(Wp).astype(bf16),  b2(bp),
        p1x1(Wa1).astype(bf16), b2(ba1),
        p1x1(Wa2).astype(bf16), b2(ba2),
        p1x1(Wc1),              b2(bc1),      # ca branch stays f32 (VPU GEMV)
        p1x1(Wc2),              b2(bc2),
        jnp.transpose(We, (2, 3, 1, 0)).reshape(9 * Cl, Co).astype(bf16), b2(be),
    ]

    in_specs = [
        pl.BlockSpec((bt, Ch, HW), lambda g: (g, 0, 0)),
        pl.BlockSpec((bt, Cl, HW), lambda g: (g, 0, 0)),
    ]
    for arr in weight_args:
        in_specs.append(pl.BlockSpec(arr.shape, lambda g, nd=arr.ndim: (0,) * nd))

    kernel = functools.partial(dfim_kernel, H=H, W=W)

    out_blocks = pl.pallas_call(
        kernel,
        out_shape=jax.ShapeDtypeStruct((G, Co, M), jnp.float32),
        grid_spec=pltpu.PrefetchScalarGridSpec(
            num_scalar_prefetch=0,
            grid=(G,),
            in_specs=in_specs,
            out_specs=pl.BlockSpec((1, Co, M), lambda g: (g, 0, 0)),
        ),
        # Batch groups are independent -> "parallel" lets v7x shard the grid
        # over its 2 TensorCores (neutral on single-TC v5e/v6e).
        compiler_params=pltpu.CompilerParams(dimension_semantics=("parallel",)),
        # TODO(synk): for production H/W/C re-derive bt (and consider tiling H
        # in multiples of 8 with a 1-row halo) plus an explicit
        # vmem_limit_bytes against v7x's 64 MiB VMEM budget.
    )(xh, xl, *weight_args)

    # (G, Co, bt*H*W) -> NCHW (B, Co, H, W): cheap small reshape/transpose.
    out = out_blocks.reshape(G, Co, bt, H, W)
    return jnp.transpose(out, (0, 2, 1, 3, 4)).reshape(B, Co, H, W)


def dfim_reference(x_high, x_low, params, mirror_bf16=False):
    """Pure-JAX NCHW reference mirroring the PyTorch forward with folded BN.
    With mirror_bf16=True it applies the same bf16 rounding of MXU matmul
    operands that the Pallas kernel uses (f32 accumulation), so it matches the
    kernel to accumulation-order accuracy; with False it is plain f32."""
    (Wp, bp), (Wa1, ba1), (Wa2, ba2), (Wc1, bc1), (Wc2, bc2), (We, be) = params

    def rnd(x):
        return x.astype(jnp.bfloat16).astype(jnp.float32) if mirror_bf16 else x

    def conv(x, Wf, b, pad, quant):
        if quant:
            x, Wf = rnd(x), rnd(Wf)
        y = lax.conv_general_dilated(
            x, Wf, window_strides=(1, 1), padding=[(pad, pad), (pad, pad)],
            dimension_numbers=('NCHW', 'OIHW', 'NCHW'),
            precision=lax.Precision.HIGHEST)
        return y + b[None, :, None, None]

    xh_in = rnd(x_high)
    xl_in = rnd(x_low)
    plus = jnp.maximum(conv(xh_in, Wp, bp, 0, quant=True), 0.0)
    t = jnp.maximum(conv(xl_in, Wa1, ba1, 0, quant=True), 0.0)
    pa = _sigmoid(conv(t, Wa2, ba2, 0, quant=True))
    pooled = jnp.mean(plus, axis=(2, 3), keepdims=True)
    t2 = jnp.maximum(conv(pooled, Wc1, bc1, 0, quant=False), 0.0)   # ca branch f32
    ca = _sigmoid(conv(t2, Wc2, bc2, 0, quant=False))
    feat = xl_in + plus
    feat = jnp.maximum(conv(feat, We, be, 1, quant=True), 0.0)
    return feat * ca * pa


if __name__ == "__main__":
    planes_high, planes_low, planes_out = 16, 32, 32   # planes_out == planes_low required
    B, H, W = 2, 8, 8

    key = jax.random.PRNGKey(0)
    keys = jax.random.split(key, 8)
    x_high = jax.random.normal(keys[0], (B, planes_high, H, W), jnp.float32)
    x_low = jax.random.normal(keys[1], (B, planes_low, H, W), jnp.float32)

    params = (
        doconv_folded(keys[2], planes_high, planes_low, 1, 1),        # plus_conv
        doconv_folded(keys[3], planes_low, planes_low // 4, 1, 1),    # pa conv 1
        doconv_folded(keys[4], planes_low // 4, planes_low, 1, 1),    # pa conv 2
        doconv_folded(keys[5], planes_low, planes_low // 4, 1, 1),    # ca conv 1
        doconv_folded(keys[6], planes_low // 4, planes_low, 1, 1),    # ca conv 2
        doconv_folded(keys[7], planes_low, planes_out, 3, 3),         # end_conv
    )

    out = dfim_forward(x_high, x_low, params)
    jax.block_until_ready(out)
    assert out.shape == (B, planes_out, H, W), out.shape

    # Tight check against a reference that mirrors the kernel's bf16 MXU
    # operand rounding (f32 accumulation) — verifies the kernel math exactly.
    ref_q = dfim_reference(x_high, x_low, params, mirror_bf16=True)
    err_q = float(jnp.max(jnp.abs(out - ref_q)))
    assert err_q < 2e-3, f"mirrored-bf16 max abs err {err_q}"

    # Loose check against the pure-f32 module semantics (bounds the bf16
    # quantization error of the MXU matmul operands).
    ref_f = dfim_reference(x_high, x_low, params, mirror_bf16=False)
    err_f = float(jnp.max(jnp.abs(out - ref_f)))
    assert err_f < 1e-1, f"f32 max abs err {err_f}"

    print("KERNEL_OK")
</pallas_src>

<mosaic_0001>
module attributes {stable_mosaic.version = 11 : i64} {
  func.func @dfim_kernel(%arg0: i32, %arg1: memref<2x16x64xbf16, #tpu.memory_space<vmem>>, %arg2: memref<2x32x64xbf16, #tpu.memory_space<vmem>>, %arg3: memref<16x32xbf16, #tpu.memory_space<vmem>>, %arg4: memref<1x32xf32, #tpu.memory_space<vmem>>, %arg5: memref<32x8xbf16, #tpu.memory_space<vmem>>, %arg6: memref<1x8xf32, #tpu.memory_space<vmem>>, %arg7: memref<8x32xbf16, #tpu.memory_space<vmem>>, %arg8: memref<1x32xf32, #tpu.memory_space<vmem>>, %arg9: memref<32x8xf32, #tpu.memory_space<vmem>>, %arg10: memref<1x8xf32, #tpu.memory_space<vmem>>, %arg11: memref<8x32xf32, #tpu.memory_space<vmem>>, %arg12: memref<1x32xf32, #tpu.memory_space<vmem>>, %arg13: memref<288x32xbf16, #tpu.memory_space<vmem>>, %arg14: memref<1x32xf32, #tpu.memory_space<vmem>>, %arg15: memref<1x32x128xf32, #tpu.memory_space<vmem>>) attributes {dimension_semantics = [#tpu.dimension_semantics<parallel>], iteration_bounds = array<i64: 1>, scalar_prefetch = 0 : i64, scratch_operands = 0 : i64, tpu.core_type = #tpu.core_type<tc>, window_params = [{transform_indices = @transform_0, window_bounds = array<i64: 2, 16, 64>}, {transform_indices = @transform_1, window_bounds = array<i64: 2, 32, 64>}, {pipeline_mode = #tpu.pipeline_mode<synchronous>, transform_indices = @transform_2, window_bounds = array<i64: 16, 32>}, {pipeline_mode = #tpu.pipeline_mode<synchronous>, transform_indices = @transform_3, window_bounds = array<i64: 1, 32>}, {pipeline_mode = #tpu.pipeline_mode<synchronous>, transform_indices = @transform_4, window_bounds = array<i64: 32, 8>}, {pipeline_mode = #tpu.pipeline_mode<synchronous>, transform_indices = @transform_5, window_bounds = array<i64: 1, 8>}, {pipeline_mode = #tpu.pipeline_mode<synchronous>, transform_indices = @transform_6, window_bounds = array<i64: 8, 32>}, {pipeline_mode = #tpu.pipeline_mode<synchronous>, transform_indices = @transform_7, window_bounds = array<i64: 1, 32>}, {pipeline_mode = #tpu.pipeline_mode<synchronous>, transform_indices = @transform_8, window_bounds = array<i64: 32, 8>}, {pipeline_mode = #tpu.pipeline_mode<synchronous>, transform_indices = @transform_9, window_bounds = array<i64: 1, 8>}, {pipeline_mode = #tpu.pipeline_mode<synchronous>, transform_indices = @transform_10, window_bounds = array<i64: 8, 32>}, {pipeline_mode = #tpu.pipeline_mode<synchronous>, transform_indices = @transform_11, window_bounds = array<i64: 1, 32>}, {pipeline_mode = #tpu.pipeline_mode<synchronous>, transform_indices = @transform_12, window_bounds = array<i64: 288, 32>}, {pipeline_mode = #tpu.pipeline_mode<synchronous>, transform_indices = @transform_13, window_bounds = array<i64: 1, 32>}, {transform_indices = @transform_14, window_bounds = array<i64: 1, 32, 128>}]} {
    %c0 = arith.constant 0 : index
    %c0_0 = arith.constant 0 : index
    %c0_1 = arith.constant 0 : index
    %0 = vector.load %arg1[%c0, %c0_0, %c0_1] : memref<2x16x64xbf16, #tpu.memory_space<vmem>>, vector<2x16x64xbf16>
    %1 = arith.extf %0 : vector<2x16x64xbf16> to vector<2x16x64xf32>
    %2 = tpu.transpose %1, [0, 2, 1] : vector<2x16x64xf32> -> vector<2x64x16xf32>
    %3 = vector.shape_cast %2 : vector<2x64x16xf32> to vector<128x16xf32>
    %c0_2 = arith.constant 0 : index
    %c0_3 = arith.constant 0 : index
    %c0_4 = arith.constant 0 : index
    %4 = vector.load %arg2[%c0_2, %c0_3, %c0_4] : memref<2x32x64xbf16, #tpu.memory_space<vmem>>, vector<2x32x64xbf16>
    %5 = arith.extf %4 : vector<2x32x64xbf16> to vector<2x32x64xf32>
    %6 = tpu.transpose %5, [0, 2, 1] : vector<2x32x64xf32> -> vector<2x64x32xf32>
    %7 = vector.shape_cast %6 : vector<2x64x32xf32> to vector<128x32xf32>
    %8 = arith.truncf %3 : vector<128x16xf32> to vector<128x16xbf16>
    %9 = arith.truncf %7 : vector<128x32xf32> to vector<128x32xbf16>
    %c0_5 = arith.constant 0 : index
    %c0_6 = arith.constant 0 : index
    %10 = vector.load %arg3[%c0_5, %c0_6] : memref<16x32xbf16, #tpu.memory_space<vmem>>, vector<16x32xbf16>
    %cst = arith.constant dense<0.000000e+00> : vector<128x32xf32>
    %11 = tpu.matmul %8, %10, %cst {dimension_numbers = #tpu.dot_dimension_numbers<[1], [0], [0], [1], [0, 0, 1, 1], [], []>} : vector<128x16xbf16>, vector<16x32xbf16>, vector<128x32xf32> -> vector<128x32xf32>
    %c0_7 = arith.constant 0 : index
    %c0_8 = arith.constant 0 : index
    %12 = vector.load %arg4[%c0_7, %c0_8] : memref<1x32xf32, #tpu.memory_space<vmem>>, vector<1x32xf32>
    %13 = vector.broadcast %12 : vector<1x32xf32> to vector<128x32xf32>
    %14 = arith.addf %11, %13 : vector<128x32xf32>
    %cst_9 = arith.constant 0.000000e+00 : f32
    %15 = vector.broadcast %cst_9 : f32 to vector<128x32xf32>
    %16 = arith.maximumf %14, %15 : vector<128x32xf32>
    %c0_10 = arith.constant 0 : index
    %c0_11 = arith.constant 0 : index
    %17 = vector.load %arg5[%c0_10, %c0_11] : memref<32x8xbf16, #tpu.memory_space<vmem>>, vector<32x8xbf16>
    %cst_12 = arith.constant dense<0.000000e+00> : vector<128x8xf32>
    %18 = tpu.matmul %9, %17, %cst_12 {dimension_numbers = #tpu.dot_dimension_numbers<[1], [0], [0], [1], [0, 0, 1, 1], [], []>} : vector<128x32xbf16>, vector<32x8xbf16>, vector<128x8xf32> -> vector<128x8xf32>
    %c0_13 = arith.constant 0 : index
    %c0_14 = arith.constant 0 : index
    %19 = vector.load %arg6[%c0_13, %c0_14] : memref<1x8xf32, #tpu.memory_space<vmem>>, vector<1x8xf32>
    %20 = vector.broadcast %19 : vector<1x8xf32> to vector<128x8xf32>
    %21 = arith.addf %18, %20 : vector<128x8xf32>
    %cst_15 = arith.constant 0.000000e+00 : f32
    %22 = vector.broadcast %cst_15 : f32 to vector<128x8xf32>
    %23 = arith.maximumf %21, %22 : vector<128x8xf32>
    %24 = arith.truncf %23 : vector<128x8xf32> to vector<128x8xbf16>
    %c0_16 = arith.constant 0 : index
    %c0_17 = arith.constant 0 : index
    %25 = vector.load %arg7[%c0_16, %c0_17] : memref<8x32xbf16, #tpu.memory_space<vmem>>, vector<8x32xbf16>
    %cst_18 = arith.constant dense<0.000000e+00> : vector<128x32xf32>
    %26 = tpu.matmul %24, %25, %cst_18 {dimension_numbers = #tpu.dot_dimension_numbers<[1], [0], [0], [1], [0, 0, 1, 1], [], []>} : vector<128x8xbf16>, vector<8x32xbf16>, vector<128x32xf32> -> vector<128x32xf32>
    %c0_19 = arith.constant 0 : index
    %c0_20 = arith.constant 0 : index
    %27 = vector.load %arg8[%c0_19, %c0_20] : memref<1x32xf32, #tpu.memory_space<vmem>>, vector<1x32xf32>
    %28 = vector.broadcast %27 : vector<1x32xf32> to vector<128x32xf32>
    %29 = arith.addf %26, %28 : vector<128x32xf32>
    %cst_21 = arith.constant 0.000000e+00 : f32
    %30 = vector.broadcast %cst_21 : f32 to vector<128x32xf32>
    %31 = arith.subf %30, %29 : vector<128x32xf32>
    %32 = math.exp %31 : vector<128x32xf32>
    %cst_22 = arith.constant 1.000000e+00 : f32
    %33 = vector.broadcast %cst_22 : f32 to vector<128x32xf32>
    %34 = arith.addf %33, %32 : vector<128x32xf32>
    %cst_23 = arith.constant 1.000000e+00 : f32
    %35 = vector.broadcast %cst_23 : f32 to vector<128x32xf32>
    %36 = arith.divf %35, %34 : vector<128x32xf32>
    %37 = vector.shape_cast %16 : vector<128x32xf32> to vector<2x64x32xf32>
    %cst_24 = arith.constant dense<0.000000e+00> : vector<2x32xf32>
    %38 = vector.multi_reduction <add>, %37, %cst_24 [1] : vector<2x64x32xf32> to vector<2x32xf32>
    %cst_25 = arith.constant 1.562500e-02 : f32
    %39 = vector.broadcast %cst_25 : f32 to vector<2x32xf32>
    %40 = arith.mulf %38, %39 : vector<2x32xf32>
    %c0_26 = arith.constant 0 : index
    %c0_27 = arith.constant 0 : index
    %41 = vector.load %arg9[%c0_26, %c0_27] : memref<32x8xf32, #tpu.memory_space<vmem>>, vector<32x8xf32>
    %42 = vector.shape_cast %40 : vector<2x32xf32> to vector<2x32x1xf32>
    %43 = vector.shape_cast %41 : vector<32x8xf32> to vector<1x32x8xf32>
    %44 = vector.broadcast %42 : vector<2x32x1xf32> to vector<2x32x8xf32>
    %45 = vector.broadcast %43 : vector<1x32x8xf32> to vector<2x32x8xf32>
    %46 = arith.mulf %44, %45 : vector<2x32x8xf32>
    %cst_28 = arith.constant dense<0.000000e+00> : vector<2x8xf32>
    %47 = vector.multi_reduction <add>, %46, %cst_28 [1] : vector<2x32x8xf32> to vector<2x8xf32>
    %c0_29 = arith.constant 0 : index
    %c0_30 = arith.constant 0 : index
    %48 = vector.load %arg10[%c0_29, %c0_30] : memref<1x8xf32, #tpu.memory_space<vmem>>, vector<1x8xf32>
    %49 = vector.broadcast %48 : vector<1x8xf32> to vector<2x8xf32>
    %50 = arith.addf %47, %49 : vector<2x8xf32>
    %cst_31 = arith.constant 0.000000e+00 : f32
    %51 = vector.broadcast %cst_31 : f32 to vector<2x8xf32>
    %52 = arith.maximumf %50, %51 : vector<2x8xf32>
    %c0_32 = arith.constant 0 : index
    %c0_33 = arith.constant 0 : index
    %53 = vector.load %arg11[%c0_32, %c0_33] : memref<8x32xf32, #tpu.memory_space<vmem>>, vector<8x32xf32>
    %54 = vector.shape_cast %52 : vector<2x8xf32> to vector<2x8x1xf32>
    %55 = vector.shape_cast %53 : vector<8x32xf32> to vector<1x8x32xf32>
    %56 = vector.broadcast %54 : vector<2x8x1xf32> to vector<2x8x32xf32>
    %57 = vector.broadcast %55 : vector<1x8x32xf32> to vector<2x8x32xf32>
    %58 = arith.mulf %56, %57 : vector<2x8x32xf32>
    %cst_34 = arith.constant dense<0.000000e+00> : vector<2x32xf32>
    %59 = vector.multi_reduction <add>, %58, %cst_34 [1] : vector<2x8x32xf32> to vector<2x32xf32>
    %c0_35 = arith.constant 0 : index
    %c0_36 = arith.constant 0 : index
    %60 = vector.load %arg12[%c0_35, %c0_36] : memref<1x32xf32, #tpu.memory_space<vmem>>, vector<1x32xf32>
    %61 = vector.broadcast %60 : vector<1x32xf32> to vector<2x32xf32>
    %62 = arith.addf %59, %61 : vector<2x32xf32>
    %cst_37 = arith.constant 0.000000e+00 : f32
    %63 = vector.broadcast %cst_37 : f32 to vector<2x32xf32>
    %64 = arith.subf %63, %62 : vector<2x32xf32>
    %65 = math.exp %64 : vector<2x32xf32>
    %cst_38 = arith.constant 1.000000e+00 : f32
    %66 = vector.broadcast %cst_38 : f32 to vector<2x32xf32>
    %67 = arith.addf %66, %65 : vector<2x32xf32>
    %cst_39 = arith.constant 1.000000e+00 : f32
    %68 = vector.broadcast %cst_39 : f32 to vector<2x32xf32>
    %69 = arith.divf %68, %67 : vector<2x32xf32>
    %70 = arith.addf %7, %16 : vector<128x32xf32>
    %71 = vector.shape_cast %70 : vector<128x32xf32> to vector<2x8x8x32xf32>
    %cst_40 = arith.constant 0.000000e+00 : f32
    %72 = vector.broadcast %cst_40 : f32 to vector<2x1x8x32xf32>
    %73 = vector.extract_strided_slice %71 {offsets = [0, 0, 0, 0], sizes = [2, 7, 8, 32], strides = [1, 1, 1, 1]} : vector<2x8x8x32xf32> to vector<2x7x8x32xf32>
    %74 = tpu.concatenate %72, %73 in 1 : vector<2x1x8x32xf32>, vector<2x7x8x32xf32> -> vector<2x8x8x32xf32>
    %cst_41 = arith.constant 0.000000e+00 : f32
    %75 = vector.broadcast %cst_41 : f32 to vector<2x8x1x32xf32>
    %76 = vector.extract_strided_slice %74 {offsets = [0, 0, 0, 0], sizes = [2, 8, 7, 32], strides = [1, 1, 1, 1]} : vector<2x8x8x32xf32> to vector<2x8x7x32xf32>
    %77 = tpu.concatenate %75, %76 in 2 : vector<2x8x1x32xf32>, vector<2x8x7x32xf32> -> vector<2x8x8x32xf32>
    %cst_42 = arith.constant 0.000000e+00 : f32
    %78 = vector.broadcast %cst_42 : f32 to vector<2x1x8x32xf32>
    %79 = vector.extract_strided_slice %71 {offsets = [0, 0, 0, 0], sizes = [2, 7, 8, 32], strides = [1, 1, 1, 1]} : vector<2x8x8x32xf32> to vector<2x7x8x32xf32>
    %80 = tpu.concatenate %78, %79 in 1 : vector<2x1x8x32xf32>, vector<2x7x8x32xf32> -> vector<2x8x8x32xf32>
    %cst_43 = arith.constant 0.000000e+00 : f32
    %81 = vector.broadcast %cst_43 : f32 to vector<2x1x8x32xf32>
    %82 = vector.extract_strided_slice %71 {offsets = [0, 0, 0, 0], sizes = [2, 7, 8, 32], strides = [1, 1, 1, 1]} : vector<2x8x8x32xf32> to vector<2x7x8x32xf32>
    %83 = tpu.concatenate %81, %82 in 1 : vector<2x1x8x32xf32>, vector<2x7x8x32xf32> -> vector<2x8x8x32xf32>
    %84 = vector.extract_strided_slice %83 {offsets = [0, 0, 1, 0], sizes = [2, 8, 7, 32], strides = [1, 1, 1, 1]} : vector<2x8x8x32xf32> to vector<2x8x7x32xf32>
    %cst_44 = arith.constant 0.000000e+00 : f32
    %85 = vector.broadcast %cst_44 : f32 to vector<2x8x1x32xf32>
    %86 = tpu.concatenate %84, %85 in 2 : vector<2x8x7x32xf32>, vector<2x8x1x32xf32> -> vector<2x8x8x32xf32>
    %cst_45 = arith.constant 0.000000e+00 : f32
    %87 = vector.broadcast %cst_45 : f32 to vector<2x8x1x32xf32>
    %88 = vector.extract_strided_slice %71 {offsets = [0, 0, 0, 0], sizes = [2, 8, 7, 32], strides = [1, 1, 1, 1]} : vector<2x8x8x32xf32> to vector<2x8x7x32xf32>
    %89 = tpu.concatenate %87, %88 in 2 : vector<2x8x1x32xf32>, vector<2x8x7x32xf32> -> vector<2x8x8x32xf32>
    %90 = vector.extract_strided_slice %71 {offsets = [0, 0, 1, 0], sizes = [2, 8, 7, 32], strides = [1, 1, 1, 1]} : vector<2x8x8x32xf32> to vector<2x8x7x32xf32>
    %cst_46 = arith.constant 0.000000e+00 : f32
    %91 = vector.broadcast %cst_46 : f32 to vector<2x8x1x32xf32>
    %92 = tpu.concatenate %90, %91 in 2 : vector<2x8x7x32xf32>, vector<2x8x1x32xf32> -> vector<2x8x8x32xf32>
    %93 = vector.extract_strided_slice %71 {offsets = [0, 1, 0, 0], sizes = [2, 7, 8, 32], strides = [1, 1, 1, 1]} : vector<2x8x8x32xf32> to vector<2x7x8x32xf32>
    %cst_47 = arith.constant 0.000000e+00 : f32
    %94 = vector.broadcast %cst_47 : f32 to vector<2x1x8x32xf32>
    %95 = tpu.concatenate %93, %94 in 1 : vector<2x7x8x32xf32>, vector<2x1x8x32xf32> -> vector<2x8x8x32xf32>
    %cst_48 = arith.constant 0.000000e+00 : f32
    %96 = vector.broadcast %cst_48 : f32 to vector<2x8x1x32xf32>
    %97 = vector.extract_strided_slice %95 {offsets = [0, 0, 0, 0], sizes = [2, 8, 7, 32], strides = [1, 1, 1, 1]} : vector<2x8x8x32xf32> to vector<2x8x7x32xf32>
    %98 = tpu.concatenate %96, %97 in 2 : vector<2x8x1x32xf32>, vector<2x8x7x32xf32> -> vector<2x8x8x32xf32>
    %99 = vector.extract_strided_slice %71 {offsets = [0, 1, 0, 0], sizes = [2, 7, 8, 32], strides = [1, 1, 1, 1]} : vector<2x8x8x32xf32> to vector<2x7x8x32xf32>
    %cst_49 = arith.constant 0.000000e+00 : f32
    %100 = vector.broadcast %cst_49 : f32 to vector<2x1x8x32xf32>
    %101 = tpu.concatenate %99, %100 in 1 : vector<2x7x8x32xf32>, vector<2x1x8x32xf32> -> vector<2x8x8x32xf32>
    %102 = vector.extract_strided_slice %71 {offsets = [0, 1, 0, 0], sizes = [2, 7, 8, 32], strides = [1, 1, 1, 1]} : vector<2x8x8x32xf32> to vector<2x7x8x32xf32>
    %cst_50 = arith.constant 0.000000e+00 : f32
    %103 = vector.broadcast %cst_50 : f32 to vector<2x1x8x32xf32>
    %104 = tpu.concatenate %102, %103 in 1 : vector<2x7x8x32xf32>, vector<2x1x8x32xf32> -> vector<2x8x8x32xf32>
    %105 = vector.extract_strided_slice %104 {offsets = [0, 0, 1, 0], sizes = [2, 8, 7, 32], strides = [1, 1, 1, 1]} : vector<2x8x8x32xf32> to vector<2x8x7x32xf32>
    %cst_51 = arith.constant 0.000000e+00 : f32
    %106 = vector.broadcast %cst_51 : f32 to vector<2x8x1x32xf32>
    %107 = tpu.concatenate %105, %106 in 2 : vector<2x8x7x32xf32>, vector<2x8x1x32xf32> -> vector<2x8x8x32xf32>
    %108 = tpu.concatenate %77, %80, %86, %89, %71, %92, %98, %101, %107 in 3 : vector<2x8x8x32xf32>, vector<2x8x8x32xf32>, vector<2x8x8x32xf32>, vector<2x8x8x32xf32>, vector<2x8x8x32xf32>, vector<2x8x8x32xf32>, vector<2x8x8x32xf32>, vector<2x8x8x32xf32>, vector<2x8x8x32xf32> -> vector<2x8x8x288xf32>
    %109 = vector.shape_cast %108 : vector<2x8x8x288xf32> to vector<128x288xf32>
    %110 = arith.truncf %109 : vector<128x288xf32> to vector<128x288xbf16>
    %c0_52 = arith.constant 0 : index
    %c0_53 = arith.constant 0 : index
    %111 = vector.load %arg13[%c0_52, %c0_53] : memref<288x32xbf16, #tpu.memory_space<vmem>>, vector<288x32xbf16>
    %cst_54 = arith.constant dense<0.000000e+00> : vector<128x32xf32>
    %112 = tpu.matmul %110, %111, %cst_54 {dimension_numbers = #tpu.dot_dimension_numbers<[1], [0], [0], [1], [0, 0, 1, 1], [], []>} : vector<128x288xbf16>, vector<288x32xbf16>, vector<128x32xf32> -> vector<128x32xf32>
    %c0_55 = arith.constant 0 : index
    %c0_56 = arith.constant 0 : index
    %113 = vector.load %arg14[%c0_55, %c0_56] : memref<1x32xf32, #tpu.memory_space<vmem>>, vector<1x32xf32>
    %114 = vector.broadcast %113 : vector<1x32xf32> to vector<128x32xf32>
    %115 = arith.addf %112, %114 : vector<128x32xf32>
    %cst_57 = arith.constant 0.000000e+00 : f32
    %116 = vector.broadcast %cst_57 : f32 to vector<128x32xf32>
    %117 = arith.maximumf %115, %116 : vector<128x32xf32>
    %118 = vector.shape_cast %69 : vector<2x32xf32> to vector<2x1x32xf32>
    %119 = vector.shape_cast %118 : vector<2x1x32xf32> to vector<2x1x32xf32>
    %120 = vector.broadcast %119 : vector<2x1x32xf32> to vector<2x64x32xf32>
    %121 = vector.shape_cast %120 : vector<2x64x32xf32> to vector<128x32xf32>
    %122 = arith.mulf %117, %121 : vector<128x32xf32>
    %123 = arith.mulf %122, %36 : vector<128x32xf32>
    %124 = tpu.transpose %123, [1, 0] : vector<128x32xf32> -> vector<32x128xf32>
    %c0_58 = arith.constant 0 : index
    %c0_59 = arith.constant 0 : index
    %c0_60 = arith.constant 0 : index
    %125 = vector.load %arg15[%c0_58, %c0_59, %c0_60] : memref<1x32x128xf32, #tpu.memory_space<vmem>>, vector<1x32x128xf32>
    %126 = vector.shape_cast %125 : vector<1x32x128xf32> to vector<32x128xf32>
    %127 = vector.shape_cast %124 : vector<32x128xf32> to vector<1x32x128xf32>
    tpu.vector_store %arg15[%c0_58, %c0_59, %c0_60], %127 {strides = array<i32>} : memref<1x32x128xf32, #tpu.memory_space<vmem>>, vector<1x32x128xf32>,
    return
  }
  func.func @transform_0(%arg0: i32) -> (i32, i32, i32) {
    %c0_i32 = arith.constant 0 : i32
    %c0_i32_0 = arith.constant 0 : i32
    %c0_i32_1 = arith.constant 0 : i32
    return %arg0, %c0_i32, %c0_i32_0 : i32, i32, i32
  }
  func.func @transform_1(%arg0: i32) -> (i32, i32, i32) {
    %c0_i32 = arith.constant 0 : i32
    %c0_i32_0 = arith.constant 0 : i32
    %c0_i32_1 = arith.constant 0 : i32
    return %arg0, %c0_i32, %c0_i32_0 : i32, i32, i32
  }
  func.func @transform_2(%arg0: i32) -> (i32, i32) {
    %c0_i32 = arith.constant 0 : i32
    %c0_i32_0 = arith.constant 0 : i32
    %c0_i32_1 = arith.constant 0 : i32
    return %c0_i32, %c0_i32_0 : i32, i32
  }
  func.func @transform_3(%arg0: i32) -> (i32, i32) {
    %c0_i32 = arith.constant 0 : i32
    %c0_i32_0 = arith.constant 0 : i32
    %c0_i32_1 = arith.constant 0 : i32
    return %c0_i32, %c0_i32_0 : i32, i32
  }
  func.func @transform_4(%arg0: i32) -> (i32, i32) {
    %c0_i32 = arith.constant 0 : i32
    %c0_i32_0 = arith.constant 0 : i32
    %c0_i32_1 = arith.constant 0 : i32
    return %c0_i32, %c0_i32_0 : i32, i32
  }
  func.func @transform_5(%arg0: i32) -> (i32, i32) {
    %c0_i32 = arith.constant 0 : i32
    %c0_i32_0 = arith.constant 0 : i32
    %c0_i32_1 = arith.constant 0 : i32
    return %c0_i32, %c0_i32_0 : i32, i32
  }
  func.func @transform_6(%arg0: i32) -> (i32, i32) {
    %c0_i32 = arith.constant 0 : i32
    %c0_i32_0 = arith.constant 0 : i32
    %c0_i32_1 = arith.constant 0 : i32
    return %c0_i32, %c0_i32_0 : i32, i32
  }
  func.func @transform_7(%arg0: i32) -> (i32, i32) {
    %c0_i32 = arith.constant 0 : i32
    %c0_i32_0 = arith.constant 0 : i32
    %c0_i32_1 = arith.constant 0 : i32
    return %c0_i32, %c0_i32_0 : i32, i32
  }
  func.func @transform_8(%arg0: i32) -> (i32, i32) {
    %c0_i32 = arith.constant 0 : i32
    %c0_i32_0 = arith.constant 0 : i32
    %c0_i32_1 = arith.constant 0 : i32
    return %c0_i32, %c0_i32_0 : i32, i32
  }
  func.func @transform_9(%arg0: i32) -> (i32, i32) {
    %c0_i32 = arith.constant 0 : i32
    %c0_i32_0 = arith.constant 0 : i32
    %c0_i32_1 = arith.constant 0 : i32
    return %c0_i32, %c0_i32_0 : i32, i32
  }
  func.func @transform_10(%arg0: i32) -> (i32, i32) {
    %c0_i32 = arith.constant 0 : i32
    %c0_i32_0 = arith.constant 0 : i32
    %c0_i32_1 = arith.constant 0 : i32
    return %c0_i32, %c0_i32_0 : i32, i32
  }
  func.func @transform_11(%arg0: i32) -> (i32, i32) {
    %c0_i32 = arith.constant 0 : i32
    %c0_i32_0 = arith.constant 0 : i32
    %c0_i32_1 = arith.constant 0 : i32
    return %c0_i32, %c0_i32_0 : i32, i32
  }
  func.func @transform_12(%arg0: i32) -> (i32, i32) {
    %c0_i32 = arith.constant 0 : i32
    %c0_i32_0 = arith.constant 0 : i32
    %c0_i32_1 = arith.constant 0 : i32
    return %c0_i32, %c0_i32_0 : i32, i32
  }
  func.func @transform_13(%arg0: i32) -> (i32, i32) {
    %c0_i32 = arith.constant 0 : i32
    %c0_i32_0 = arith.constant 0 : i32
    %c0_i32_1 = arith.constant 0 : i32
    return %c0_i32, %c0_i32_0 : i32, i32
  }
  func.func @transform_14(%arg0: i32) -> (i32, i32, i32) {
    %c0_i32 = arith.constant 0 : i32
    %c0_i32_0 = arith.constant 0 : i32
    %c0_i32_1 = arith.constant 0 : i32
    return %arg0, %c0_i32, %c0_i32_0 : i32, i32, i32
  }
}

</mosaic_0001>

<llo_original>
// kernel: tpu_custom_call.1
$region0: #{tpu_custom_call.1}
  #allocation0 [shape = 'u32[]', space=smem, size = 0x4, offset = 0x4, fixed_abs, tag = 'smem constant byte address 0x4 - core index']
  #allocation1 [shape = 'u32[144,128]{1,0:T(1,128)}', space=vmem, size = 0x12000, scoped, tag = 'internal scratch']
  %s0 = inlined_call_operand.vmem [shape: bf16[2,16,64], index: 0, kind: input, shape index: {}]
  %s1 = inlined_call_operand.vmem [shape: bf16[2,32,64], index: 1, kind: input, shape index: {}]
  %s2 = inlined_call_operand.vmem [shape: bf16[16,32], index: 2, kind: input, shape index: {}]
  %s3 = inlined_call_operand.vmem [shape: f32[1,32], index: 3, kind: input, shape index: {}]
  %s4 = inlined_call_operand.vmem [shape: bf16[32,8], index: 4, kind: input, shape index: {}]
  %s5 = inlined_call_operand.vmem [shape: f32[1,8], index: 5, kind: input, shape index: {}]
  %s6 = inlined_call_operand.vmem [shape: bf16[8,32], index: 6, kind: input, shape index: {}]
  %s7 = inlined_call_operand.vmem [shape: f32[1,32], index: 7, kind: input, shape index: {}]
  %s8 = inlined_call_operand.vmem [shape: f32[32,8], index: 8, kind: input, shape index: {}]
  %s9 = inlined_call_operand.vmem [shape: f32[1,8], index: 9, kind: input, shape index: {}]
  %s10 = inlined_call_operand.vmem [shape: f32[8,32], index: 10, kind: input, shape index: {}]
  %s11 = inlined_call_operand.vmem [shape: f32[1,32], index: 11, kind: input, shape index: {}]
  %s12 = inlined_call_operand.vmem [shape: bf16[288,32], index: 12, kind: input, shape index: {}]
  %s13 = inlined_call_operand.vmem [shape: f32[1,32], index: 13, kind: input, shape index: {}]
  %s14 = inlined_call_operand.hbm [shape: f32[1,32,128], index: 14, kind: output, shape index: {}]
  %s15 = sld [smem:[#allocation0]]
  $region66: #{tpu_custom_call.1} parent=0
    _
  %s17 = ssub.s32 1, %s15
  %s18 = scalar_select 0, %s17, %s15
  $region1: #{tpu_custom_call.1} parent=0
    #allocation2 [shape = 'u8[16384]{0}', space=vmem, size = 0x4000, scoped, tag = 'output window, operand 0, single buffered']
    #allocation3 [shape = 's32[1]{0}', space=sflag, size = 0x4, scoped, tag = 'scoped memory for tpu_custom_call.1']
    %19 = vsyncpa [#allocation3], 0
    // Predicated region
    $region2: #{tpu_custom_call.1} parent=1 // pred_check
      _
    $region3: #{tpu_custom_call.1} parent=1 // pred_check_branch
      %21 = sbr.rel (0) target = $region5
    $region4: #{tpu_custom_call.1} parent=1 // pred_region
      _
    $region5: #{tpu_custom_call.1} parent=1 // pred_fallthru
      _
    // Predicated region
    $region6: #{tpu_custom_call.1} parent=1 // pred_check
      _
    $region7: #{tpu_custom_call.1} parent=1 // pred_check_branch
      %23 = sbr.rel (0) target = $region9
    $region8: #{tpu_custom_call.1} parent=1 // pred_region
      _
    $region9: #{tpu_custom_call.1} parent=1 // pred_fallthru
      _
    // Predicated region
    $region10: #{tpu_custom_call.1} parent=1 // pred_check
      _
    $region11: #{tpu_custom_call.1} parent=1 // pred_check_branch
      %25 = sbr.rel (0) target = $region13
    $region12: #{tpu_custom_call.1} parent=1 // pred_region
      _
    $region13: #{tpu_custom_call.1} parent=1 // pred_fallthru
      _
    // Predicated region
    $region14: #{tpu_custom_call.1} parent=1 // pred_check
      _
    $region15: #{tpu_custom_call.1} parent=1 // pred_check_branch
      %27 = sbr.rel (0) target = $region17
    $region16: #{tpu_custom_call.1} parent=1 // pred_region
      _
    $region17: #{tpu_custom_call.1} parent=1 // pred_fallthru
      _
    // Predicated region
    $region18: #{tpu_custom_call.1} parent=1 // pred_check
      _
    $region19: #{tpu_custom_call.1} parent=1 // pred_check_branch
      %29 = sbr.rel (0) target = $region21
    $region20: #{tpu_custom_call.1} parent=1 // pred_region
      _
    $region21: #{tpu_custom_call.1} parent=1 // pred_fallthru
      _
    // Predicated region
    $region22: #{tpu_custom_call.1} parent=1 // pred_check
      _
    $region23: #{tpu_custom_call.1} parent=1 // pred_check_branch
      %31 = sbr.rel (0) target = $region25
    $region24: #{tpu_custom_call.1} parent=1 // pred_region
      _
    $region25: #{tpu_custom_call.1} parent=1 // pred_fallthru
      _
    // Predicated region
    $region26: #{tpu_custom_call.1} parent=1 // pred_check
      _
    $region27: #{tpu_custom_call.1} parent=1 // pred_check_branch
      %33 = sbr.rel (0) target = $region29
    $region28: #{tpu_custom_call.1} parent=1 // pred_region
      _
    $region29: #{tpu_custom_call.1} parent=1 // pred_fallthru
      _
    // Predicated region
    $region30: #{tpu_custom_call.1} parent=1 // pred_check
      _
    $region31: #{tpu_custom_call.1} parent=1 // pred_check_branch
      %35 = sbr.rel (0) target = $region33
    $region32: #{tpu_custom_call.1} parent=1 // pred_region
      _
    $region33: #{tpu_custom_call.1} parent=1 // pred_fallthru
      _
    // Predicated region
    $region34: #{tpu_custom_call.1} parent=1 // pred_check
      _
    $region35: #{tpu_custom_call.1} parent=1 // pred_check_branch
      %37 = sbr.rel (0) target = $region37
    $region36: #{tpu_custom_call.1} parent=1 // pred_region
      _
    $region37: #{tpu_custom_call.1} parent=1 // pred_fallthru
      _
    // Predicated region
    $region38: #{tpu_custom_call.1} parent=1 // pred_check
      _
    $region39: #{tpu_custom_call.1} parent=1 // pred_check_branch
      %39 = sbr.rel (0) target = $region41
    $region40: #{tpu_custom_call.1} parent=1 // pred_region
      _
    $region41: #{tpu_custom_call.1} parent=1 // pred_fallthru
      _
    // Predicated region
    $region42: #{tpu_custom_call.1} parent=1 // pred_check
      _
    $region43: #{tpu_custom_call.1} parent=1 // pred_check_branch
      %41 = sbr.rel (0) target = $region45
    $region44: #{tpu_custom_call.1} parent=1 // pred_region
      _
    $region45: #{tpu_custom_call.1} parent=1 // pred_fallthru
      _
    // Predicated region
    $region46: #{tpu_custom_call.1} parent=1 // pred_check
      _
    $region47: #{tpu_custom_call.1} parent=1 // pred_check_branch
      %43 = sbr.rel (0) target = $region49
    $region48: #{tpu_custom_call.1} parent=1 // pred_region
      _
    $region49: #{tpu_custom_call.1} parent=1 // pred_fallthru
      _
    // Predicated region
    $region50: #{tpu_custom_call.1} parent=1 // pred_check
      _
    $region51: #{tpu_custom_call.1} parent=1 // pred_check_branch
      %45 = sbr.rel (0) target = $region53
    $region52: #{tpu_custom_call.1} parent=1 // pred_region
      _
    $region53: #{tpu_custom_call.1} parent=1 // pred_fallthru
      _
    // Predicated region
    $region54: #{tpu_custom_call.1} parent=1 // pred_check
      _
    $region55: #{tpu_custom_call.1} parent=1 // pred_check_branch
      %47 = sbr.rel (0) target = $region57
    $region56: #{tpu_custom_call.1} parent=1 // pred_region
      _
    $region57: #{tpu_custom_call.1} parent=1 // pred_fallthru
      _
    %v49 = vld [vmem:[%s0] sm:$0xf]
    %v50 = vld [vmem:[%s0 + $0x4] sm:$0xf]
    %v51 = vld [vmem:[%s0 + $0x8] sm:$0xf]
    %v52 = vld [vmem:[%s0 + $0xc] sm:$0xf]
    %v53 = vunpack.c.l.bf16 %v49
    %v54 = vunpack.c.l.bf16 %v50
    %v55 = vunpack.c.l.bf16 %v51
    %v56 = vunpack.c.l.bf16 %v52
    %57 = vxpose.xlu0.b32.start [1/16] %v53, 128
    %58 = vxpose.xlu0.b32.cont [2/16] %v54, 128
    %59 = vxpose.xlu0.b32.cont [3/16] 0.0, 128
    %60 = vxpose.xlu0.b32.cont [4/16] 0.0, 128
    %61 = vxpose.xlu0.b32.cont [5/16] 0.0, 128
    %62 = vxpose.xlu0.b32.cont [6/16] 0.0, 128
    %63 = vxpose.xlu0.b32.cont [7/16] 0.0, 128
    %64 = vxpose.xlu0.b32.cont [8/16] 0.0, 128
    %65 = vxpose.xlu0.b32.cont [9/16] 0.0, 128
    %66 = vxpose.xlu0.b32.cont [10/16] 0.0, 128
    %67 = vxpose.xlu0.b32.cont [11/16] 0.0, 128
    %68 = vxpose.xlu0.b32.cont [12/16] 0.0, 128
    %69 = vxpose.xlu0.b32.cont [13/16] 0.0, 128
    %70 = vxpose.xlu0.b32.cont [14/16] 0.0, 128
    %71 = vxpose.xlu0.b32.cont [15/16] 0.0, 128
    %72 = vxpose.xlu0.b32.end [16/16] 0.0, 128
    %v73 = vpop.trf.xlu0
    %v74 = vpop.trf.xlu0
    %v75 = vpop.trf.xlu0
    %v76 = vpop.trf.xlu0
    %v77 = vpop.trf.xlu0
    %v78 = vpop.trf.xlu0
    %v79 = vpop.trf.xlu0
    %v80 = vpop.trf.xlu0
    %v81 = vpop.trf.xlu0
    %v82 = vpop.trf.xlu0
    %v83 = vpop.trf.xlu0
    %v84 = vpop.trf.xlu0
    %v85 = vpop.trf.xlu0
    %v86 = vpop.trf.xlu0
    %v87 = vpop.trf.xlu0
    %v88 = vpop.trf.xlu0
    %89 = vxpose.xlu0.b32.start [1/16] %v55, 128
    %90 = vxpose.xlu0.b32.cont [2/16] %v56, 128
    %91 = vxpose.xlu0.b32.cont [3/16] 0.0, 128
    %92 = vxpose.xlu0.b32.cont [4/16] 0.0, 128
    %93 = vxpose.xlu0.b32.cont [5/16] 0.0, 128
    %94 = vxpose.xlu0.b32.cont [6/16] 0.0, 128
    %95 = vxpose.xlu0.b32.cont [7/16] 0.0, 128
    %96 = vxpose.xlu0.b32.cont [8/16] 0.0, 128
    %97 = vxpose.xlu0.b32.cont [9/16] 0.0, 128
    %98 = vxpose.xlu0.b32.cont [10/16] 0.0, 128
    %99 = vxpose.xlu0.b32.cont [11/16] 0.0, 128
    %100 = vxpose.xlu0.b32.cont [12/16] 0.0, 128
    %101 = vxpose.xlu0.b32.cont [13/16] 0.0, 128
    %102 = vxpose.xlu0.b32.cont [14/16] 0.0, 128
    %103 = vxpose.xlu0.b32.cont [15/16] 0.0, 128
    %104 = vxpose.xlu0.b32.end [16/16] 0.0, 128
    %v105 = vpop.trf.xlu0
    %v106 = vpop.trf.xlu0
    %v107 = vpop.trf.xlu0
    %v108 = vpop.trf.xlu0
    %v109 = vpop.trf.xlu0
    %v110 = vpop.trf.xlu0
    %v111 = vpop.trf.xlu0
    %v112 = vpop.trf.xlu0
    %v113 = vpop.trf.xlu0
    %v114 = vpop.trf.xlu0
    %v115 = vpop.trf.xlu0
    %v116 = vpop.trf.xlu0
    %v117 = vpop.trf.xlu0
    %v118 = vpop.trf.xlu0
    %v119 = vpop.trf.xlu0
    %v120 = vpop.trf.xlu0
    %v121 = vld [vmem:[%s1] sm:$0xf]
    %v122 = vld [vmem:[%s1 + $0x4] sm:$0xf]
    %v123 = vld [vmem:[%s1 + $0x8] sm:$0xf]
    %v124 = vld [vmem:[%s1 + $0xc] sm:$0xf]
    %v125 = vld [vmem:[%s1 + $0x10] sm:$0xf]
    %v126 = vld [vmem:[%s1 + $0x14] sm:$0xf]
    %v127 = vld [vmem:[%s1 + $0x18] sm:$0xf]
    %v128 = vld [vmem:[%s1 + $0x1c] sm:$0xf]
    %v129 = vunpack.c.l.bf16 %v121
    %v130 = vunpack.c.l.bf16 %v122
    %v131 = vunpack.c.l.bf16 %v123
    %v132 = vunpack.c.l.bf16 %v124
    %v133 = vunpack.c.l.bf16 %v125
    %v134 = vunpack.c.l.bf16 %v126
    %v135 = vunpack.c.l.bf16 %v127
    %v136 = vunpack.c.l.bf16 %v128
    %137 = vxpose.xlu0.b32.start [1/16] %v129, 128
    %138 = vxpose.xlu0.b32.cont [2/16] %v130, 128
    %139 = vxpose.xlu0.b32.cont [3/16] %v131, 128
    %140 = vxpose.xlu0.b32.cont [4/16] %v132, 128
    %141 = vxpose.xlu0.b32.cont [5/16] 0.0, 128
    %142 = vxpose.xlu0.b32.cont [6/16] 0.0, 128
    %143 = vxpose.xlu0.b32.cont [7/16] 0.0, 128
    %144 = vxpose.xlu0.b32.cont [8/16] 0.0, 128
    %145 = vxpose.xlu0.b32.cont [9/16] 0.0, 128
    %146 = vxpose.xlu0.b32.cont [10/16] 0.0, 128
    %147 = vxpose.xlu0.b32.cont [11/16] 0.0, 128
    %148 = vxpose.xlu0.b32.cont [12/16] 0.0, 128
    %149 = vxpose.xlu0.b32.cont [13/16] 0.0, 128
    %150 = vxpose.xlu0.b32.cont [14/16] 0.0, 128
    %151 = vxpose.xlu0.b32.cont [15/16] 0.0, 128
    %152 = vxpose.xlu0.b32.end [16/16] 0.0, 128
    %v153 = vpop.trf.xlu0
    %v154 = vpop.trf.xlu0
    %v155 = vpop.trf.xlu0
    %v156 = vpop.trf.xlu0
    %v157 = vpop.trf.xlu0
    %v158 = vpop.trf.xlu0
    %v159 = vpop.trf.xlu0
    %v160 = vpop.trf.xlu0
    %v161 = vpop.trf.xlu0
    %v162 = vpop.trf.xlu0
    %v163 = vpop.trf.xlu0
    %v164 = vpop.trf.xlu0
    %v165 = vpop.trf.xlu0
    %v166 = vpop.trf.xlu0
    %v167 = vpop.trf.xlu0
    %v168 = vpop.trf.xlu0
    %169 = vxpose.xlu0.b32.start [1/16] %v133, 128
    %170 = vxpose.xlu0.b32.cont [2/16] %v134, 128
    %171 = vxpose.xlu0.b32.cont [3/16] %v135, 128
    %172 = vxpose.xlu0.b32.cont [4/16] %v136, 128
    %173 = vxpose.xlu0.b32.cont [5/16] 0.0, 128
    %174 = vxpose.xlu0.b32.cont [6/16] 0.0, 128
    %175 = vxpose.xlu0.b32.cont [7/16] 0.0, 128
    %176 = vxpose.xlu0.b32.cont [8/16] 0.0, 128
    %177 = vxpose.xlu0.b32.cont [9/16] 0.0, 128
    %178 = vxpose.xlu0.b32.cont [10/16] 0.0, 128
    %179 = vxpose.xlu0.b32.cont [11/16] 0.0, 128
    %180 = vxpose.xlu0.b32.cont [12/16] 0.0, 128
    %181 = vxpose.xlu0.b32.cont [13/16] 0.0, 128
    %182 = vxpose.xlu0.b32.cont [14/16] 0.0, 128
    %183 = vxpose.xlu0.b32.cont [15/16] 0.0, 128
    %184 = vxpose.xlu0.b32.end [16/16] 0.0, 128
    %v185 = vpop.trf.xlu0
    %v186 = vpop.trf.xlu0
    %v187 = vpop.trf.xlu0
    %v188 = vpop.trf.xlu0
    %v189 = vpop.trf.xlu0
    %v190 = vpop.trf.xlu0
    %v191 = vpop.trf.xlu0
    %v192 = vpop.trf.xlu0
    %v193 = vpop.trf.xlu0
    %v194 = vpop.trf.xlu0
    %v195 = vpop.trf.xlu0
    %v196 = vpop.trf.xlu0
    %v197 = vpop.trf.xlu0
    %v198 = vpop.trf.xlu0
    %v199 = vpop.trf.xlu0
    %v200 = vpop.trf.xlu0
    %v201 = vpack.c.bf16 %v74, %v73
    %v202 = vpack.c.bf16 %v76, %v75
    %v203 = vpack.c.bf16 %v78, %v77
    %v204 = vpack.c.bf16 %v80, %v79
    %v205 = vpack.c.bf16 %v106, %v105
    %v206 = vpack.c.bf16 %v108, %v107
    %v207 = vpack.c.bf16 %v110, %v109
    %v208 = vpack.c.bf16 %v112, %v111
    %v209 = vpack.c.bf16 %v154, %v153
    %v210 = vpack.c.bf16 %v156, %v155
    %v211 = vpack.c.bf16 %v158, %v157
    %v212 = vpack.c.bf16 %v160, %v159
    %v213 = vpack.c.bf16 %v186, %v185
    %v214 = vpack.c.bf16 %v188, %v187
    %v215 = vpack.c.bf16 %v190, %v189
    %v216 = vpack.c.bf16 %v192, %v191
    %v217 = vld [vmem:[%s2] sm:$0xf]
    %v218 = vld [vmem:[%s2 + $0x4] sm:$0xf]
    %v219 = vld [vmem:[%s3] sm:$0x1]
    %v221 = vlaneseq
    %v222 = vshrl.u32 %v221, 7
    %v223 = vsub.s32 0, %v222
    %v224 = vrot.slane %v219, %v223
    %v228 = vunpack.c.l.b16 %v217
    %v229 = vunpack.c.l.b16 %v218
    %v230 = vpack.c.b16 %v229, %v228
    %vm232 = vcmask 130048
    %v234 = vsel %vm232, %v201, 0
    %v237 = vsel %vm232, %v202, 0
    %v240 = vsel %vm232, %v203, 0
    %v243 = vsel %vm232, %v204, 0
    %v246 = vsel %vm232, %v205, 0
    %v249 = vsel %vm232, %v206, 0
    %v252 = vsel %vm232, %v207, 0
    %v255 = vsel %vm232, %v208, 0
    %257 = vmatprep.subr.bf16.mxu0 0
    %258 = vmatpush1.bf16.msra.mxu0 %v230
    %259 = vmatprep.subr.bf16.mxu0 0
    %260 = vmatpush1.bf16.msra.mxu0 0
    %261 = vmatprep.subr.bf16.mxu0 0
    %262 = vmatpush1.bf16.msra.mxu0 0
    %263 = vmatprep.subr.bf16.mxu0 0
    %264 = vmatpush1.bf16.msra.mxu0 0
    %265 = vmatprep.subr.bf16.mxu0 0
    %266 = vmatpush1.bf16.msra.mxu0 0
    %267 = vmatprep.subr.bf16.mxu0 0
    %268 = vmatpush1.bf16.msra.mxu0 0
    %269 = vmatprep.subr.bf16.mxu0 0
    %270 = vmatpush1.bf16.msra.mxu0 0
    %271 = vmatprep.subr.bf16.mxu0 0
    %272 = vmatpush1.bf16.msra.mxu0 0
    %273 = vmatprep.subr.bf16.mxu0 0
    %274 = vmatpush1.bf16.msra.mxu0 0
    %275 = vmatprep.subr.bf16.mxu0 0
    %276 = vmatpush1.bf16.msra.mxu0 0
    %277 = vmatprep.subr.bf16.mxu0 0
    %278 = vmatpush1.bf16.msra.mxu0 0
    %279 = vmatprep.subr.bf16.mxu0 0
    %280 = vmatpush1.bf16.msra.mxu0 0
    %281 = vmatprep.subr.bf16.mxu0 0
    %282 = vmatpush1.bf16.msra.mxu0 0
    %283 = vmatprep.subr.bf16.mxu0 0
    %284 = vmatpush1.bf16.msra.mxu0 0
    %285 = vmatprep.subr.bf16.mxu0 0
    %286 = vmatpush1.bf16.msra.mxu0 0
    %287 = vmatprep.subr.bf16.mxu0 0
    %288 = vmatpush1.bf16.msra.mxu0 0
    %289 = vmatprep.mubr.bf16.mxu0 0
    %290 = vmatmul.mubr.bf16.gmra.mrb[0].mxu0 %v234
    %v291 = vpop.f32.mrb[0].mxu0
    %v292 = vadd.f32 %v224, %v291
    %v293 = vpop.f32.mrb[0].mxu0
    %v294 = vpop.f32.mrb[0].mxu0
    %v295 = vadd.f32 %v224, %v294
    %v296 = vpop.f32.mrb[0].mxu0
    %297 = vmatprep.mubr.bf16.mxu0 0
    %298 = vmatmul.mubr.bf16.gmra.mrb[0].mxu0 %v237
    %v299 = vpop.f32.mrb[0].mxu0
    %v300 = vadd.f32 %v224, %v299
    %v301 = vpop.f32.mrb[0].mxu0
    %v302 = vpop.f32.mrb[0].mxu0
    %v303 = vadd.f32 %v224, %v302
    %v304 = vpop.f32.mrb[0].mxu0
    %305 = vmatprep.mubr.bf16.mxu0 0
    %306 = vmatmul.mubr.bf16.gmra.mrb[0].mxu0 %v240
    %v307 = vpop.f32.mrb[0].mxu0
    %v308 = vadd.f32 %v224, %v307
    %v309 = vpop.f32.mrb[0].mxu0
    %v310 = vpop.f32.mrb[0].mxu0
    %v311 = vadd.f32 %v224, %v310
    %v312 = vpop.f32.mrb[0].mxu0
    %313 = vmatprep.mubr.bf16.mxu0 0
    %314 = vmatmul.mubr.bf16.gmra.mrb[0].mxu0 %v243
    %v315 = vpop.f32.mrb[0].mxu0
    %v316 = vadd.f32 %v224, %v315
    %v317 = vpop.f32.mrb[0].mxu0
    %v318 = vpop.f32.mrb[0].mxu0
    %v319 = vadd.f32 %v224, %v318
    %v320 = vpop.f32.mrb[0].mxu0
    %321 = vmatprep.mubr.bf16.mxu0 0
    %322 = vmatmul.mubr.bf16.gmra.mrb[0].mxu0 %v246
    %v323 = vpop.f32.mrb[0].mxu0
    %v324 = vadd.f32 %v224, %v323
    %v325 = vpop.f32.mrb[0].mxu0
    %v326 = vpop.f32.mrb[0].mxu0
    %v327 = vadd.f32 %v224, %v326
    %v328 = vpop.f32.mrb[0].mxu0
    %329 = vmatprep.mubr.bf16.mxu0 0
    %330 = vmatmul.mubr.bf16.gmra.mrb[0].mxu0 %v249
    %v331 = vpop.f32.mrb[0].mxu0
    %v332 = vadd.f32 %v224, %v331
    %v333 = vpop.f32.mrb[0].mxu0
    %v334 = vpop.f32.mrb[0].mxu0
    %v335 = vadd.f32 %v224, %v334
    %v336 = vpop.f32.mrb[0].mxu0
    %337 = vmatprep.mubr.bf16.mxu0 0
    %338 = vmatmul.mubr.bf16.gmra.mrb[0].mxu0 %v252
    %v339 = vpop.f32.mrb[0].mxu0
    %v340 = vadd.f32 %v224, %v339
    %v341 = vpop.f32.mrb[0].mxu0
    %v342 = vpop.f32.mrb[0].mxu0
    %v343 = vadd.f32 %v224, %v342
    %v344 = vpop.f32.mrb[0].mxu0
    %345 = vmatprep.mubr.bf16.mxu0 0
    %346 = vmatmul.mubr.bf16.gmra.mrb[0].mxu0 %v255
    %v347 = vpop.f32.mrb[0].mxu0
    %v348 = vadd.f32 %v224, %v347
    %v349 = vpop.f32.mrb[0].mxu0
    %v350 = vpop.f32.mrb[0].mxu0
    %v351 = vadd.f32 %v224, %v350
    %v352 = vpop.f32.mrb[0].mxu0
    %353 = vdwg.mxu0
    %v354 = vmax.f32 %v292, 0.0
    %v355 = vmax.f32 %v295, 0.0
    %v356 = vmax.f32 %v300, 0.0
    %v357 = vmax.f32 %v303, 0.0
    %v358 = vmax.f32 %v308, 0.0
    %v359 = vmax.f32 %v311, 0.0
    %v360 = vmax.f32 %v316, 0.0
    %v361 = vmax.f32 %v319, 0.0
    %v362 = vmax.f32 %v324, 0.0
    %v363 = vmax.f32 %v327, 0.0
    %v364 = vmax.f32 %v332, 0.0
    %v365 = vmax.f32 %v335, 0.0
    %v366 = vmax.f32 %v340, 0.0
    %v367 = vmax.f32 %v343, 0.0
    %v368 = vmax.f32 %v348, 0.0
    %v369 = vmax.f32 %v351, 0.0
    %v370 = vld [vmem:[%s4] sm:$0xf]
    %v371 = vld [vmem:[%s4 + $0x4] sm:$0xf]
    %v372 = vld [vmem:[%s4 + $0x8] sm:$0xf]
    %v373 = vld [vmem:[%s4 + $0xc] sm:$0xf]
    %v374 = vld [vmem:[%s5] sm:$0x1]
    %v376 = vlaneseq
    %v377 = vshrl.u32 %v376, 7
    %v378 = vsub.s32 0, %v377
    %v379 = vrot.slane %v374, %v378
    %v385 = vunpack.c.l.b16 %v370
    %v386 = vunpack.c.l.b16 %v371
    %v387 = vunpack.c.l.b16 %v372
    %v388 = vunpack.c.l.b16 %v373
    %v389 = vpack.c.b16 %v386, %v385
    %v390 = vpack.c.b16 %v388, %v387
    %vm393 = vcmask 261120
    %v395 = vsel %vm393, %v209, 0
    %v398 = vsel %vm393, %v210, 0
    %v401 = vsel %vm393, %v211, 0
    %v404 = vsel %vm393, %v212, 0
    %v407 = vsel %vm393, %v213, 0
    %v410 = vsel %vm393, %v214, 0
    %v413 = vsel %vm393, %v215, 0
    %v416 = vsel %vm393, %v216, 0
    %418 = vmatprep.subr.bf16.mxu0 0
    %419 = vmatpush1.bf16.msra.mxu0 %v389
    %420 = vmatprep.subr.bf16.mxu0 0
    %421 = vmatpush1.bf16.msra.mxu0 %v390
    %422 = vmatprep.subr.bf16.mxu0 0
    %423 = vmatpush1.bf16.msra.mxu0 0
    %424 = vmatprep.subr.bf16.mxu0 0
    %425 = vmatpush1.bf16.msra.mxu0 0
    %426 = vmatprep.subr.bf16.mxu0 0
    %427 = vmatpush1.bf16.msra.mxu0 0
    %428 = vmatprep.subr.bf16.mxu0 0
    %429 = vmatpush1.bf16.msra.mxu0 0
    %430 = vmatprep.subr.bf16.mxu0 0
    %431 = vmatpush1.bf16.msra.mxu0 0
    %432 = vmatprep.subr.bf16.mxu0 0
    %433 = vmatpush1.bf16.msra.mxu0 0
    %434 = vmatprep.subr.bf16.mxu0 0
    %435 = vmatpush1.bf16.msra.mxu0 0
    %436 = vmatprep.subr.bf16.mxu0 0
    %437 = vmatpush1.bf16.msra.mxu0 0
    %438 = vmatprep.subr.bf16.mxu0 0
    %439 = vmatpush1.bf16.msra.mxu0 0
    %440 = vmatprep.subr.bf16.mxu0 0
    %441 = vmatpush1.bf16.msra.mxu0 0
    %442 = vmatprep.subr.bf16.mxu0 0
    %443 = vmatpush1.bf16.msra.mxu0 0
    %444 = vmatprep.subr.bf16.mxu0 0
    %445 = vmatpush1.bf16.msra.mxu0 0
    %446 = vmatprep.subr.bf16.mxu0 0
    %447 = vmatpush1.bf16.msra.mxu0 0
    %448 = vmatprep.subr.bf16.mxu0 0
    %449 = vmatpush1.bf16.msra.mxu0 0
    %450 = vmatprep.mubr.bf16.mxu0 0
    %451 = vmatmul.mubr.bf16.gmra.mrb[0].mxu0 %v395
    %v452 = vpop.f32.mrb[0].mxu0
    %v453 = vadd.f32 %v379, %v452
    %v454 = vpop.f32.mrb[0].mxu0
    %v455 = vpop.f32.mrb[0].mxu0
    %v456 = vadd.f32 %v379, %v455
    %v457 = vpop.f32.mrb[0].mxu0
    %458 = vmatprep.mubr.bf16.mxu0 0
    %459 = vmatmul.mubr.bf16.gmra.mrb[0].mxu0 %v398
    %v460 = vpop.f32.mrb[0].mxu0
    %v461 = vadd.f32 %v379, %v460
    %v462 = vpop.f32.mrb[0].mxu0
    %v463 = vpop.f32.mrb[0].mxu0
    %v464 = vadd.f32 %v379, %v463
    %v465 = vpop.f32.mrb[0].mxu0
    %466 = vmatprep.mubr.bf16.mxu0 0
    %467 = vmatmul.mubr.bf16.gmra.mrb[0].mxu0 %v401
    %v468 = vpop.f32.mrb[0].mxu0
    %v469 = vadd.f32 %v379, %v468
    %v470 = vpop.f32.mrb[0].mxu0
    %v471 = vpop.f32.mrb[0].mxu0
    %v472 = vadd.f32 %v379, %v471
    %v473 = vpop.f32.mrb[0].mxu0
    %474 = vmatprep.mubr.bf16.mxu0 0
    %475 = vmatmul.mubr.bf16.gmra.mrb[0].mxu0 %v404
    %v476 = vpop.f32.mrb[0].mxu0
    %v477 = vadd.f32 %v379, %v476
    %v478 = vpop.f32.mrb[0].mxu0
    %v479 = vpop.f32.mrb[0].mxu0
    %v480 = vadd.f32 %v379, %v479
    %v481 = vpop.f32.mrb[0].mxu0
    %482 = vmatprep.mubr.bf16.mxu0 0
    %483 = vmatmul.mubr.bf16.gmra.mrb[0].mxu0 %v407
    %v484 = vpop.f32.mrb[0].mxu0
    %v485 = vadd.f32 %v379, %v484
    %v486 = vpop.f32.mrb[0].mxu0
    %v487 = vpop.f32.mrb[0].mxu0
    %v488 = vadd.f32 %v379, %v487
    %v489 = vpop.f32.mrb[0].mxu0
    %490 = vmatprep.mubr.bf16.mxu0 0
    %491 = vmatmul.mubr.bf16.gmra.mrb[0].mxu0 %v410
    %v492 = vpop.f32.mrb[0].mxu0
    %v493 = vadd.f32 %v379, %v492
    %v494 = vpop.f32.mrb[0].mxu0
    %v495 = vpop.f32.mrb[0].mxu0
    %v496 = vadd.f32 %v379, %v495
    %v497 = vpop.f32.mrb[0].mxu0
    %498 = vmatprep.mubr.bf16.mxu0 0
    %499 = vmatmul.mubr.bf16.gmra.mrb[0].mxu0 %v413
    %v500 = vpop.f32.mrb[0].mxu0
    %v501 = vadd.f32 %v379, %v500
    %v502 = vpop.f32.mrb[0].mxu0
    %v503 = vpop.f32.mrb[0].mxu0
    %v504 = vadd.f32 %v379, %v503
    %v505 = vpop.f32.mrb[0].mxu0
    %506 = vmatprep.mubr.bf16.mxu0 0
    %507 = vmatmul.mubr.bf16.gmra.mrb[0].mxu0 %v416
    %v508 = vpop.f32.mrb[0].mxu0
    %v509 = vadd.f32 %v379, %v508
    %v510 = vpop.f32.mrb[0].mxu0
    %v511 = vpop.f32.mrb[0].mxu0
    %v512 = vadd.f32 %v379, %v511
    %v513 = vpop.f32.mrb[0].mxu0
    %514 = vdwg.mxu0
    %v515 = vmax.f32 %v453, 0.0
    %v516 = vmax.f32 %v456, 0.0
    %v517 = vmax.f32 %v461, 0.0
    %v518 = vmax.f32 %v464, 0.0
    %v519 = vmax.f32 %v469, 0.0
    %v520 = vmax.f32 %v472, 0.0
    %v521 = vmax.f32 %v477, 0.0
    %v522 = vmax.f32 %v480, 0.0
    %v523 = vmax.f32 %v485, 0.0
    %v524 = vmax.f32 %v488, 0.0
    %v525 = vmax.f32 %v493, 0.0
    %v526 = vmax.f32 %v496, 0.0
    %v527 = vmax.f32 %v501, 0.0
    %v528 = vmax.f32 %v504, 0.0
    %v529 = vmax.f32 %v509, 0.0
    %v530 = vmax.f32 %v512, 0.0
    %v531 = vpack.c.bf16 %v516, %v515
    %v532 = vpack.c.bf16 %v518, %v517
    %v533 = vpack.c.bf16 %v520, %v519
    %v534 = vpack.c.bf16 %v522, %v521
    %v535 = vpack.c.bf16 %v524, %v523
    %v536 = vpack.c.bf16 %v526, %v525
    %v537 = vpack.c.bf16 %v528, %v527
    %v538 = vpack.c.bf16 %v530, %v529
    %v539 = vld [vmem:[%s6] sm:$0xf]
    %v540 = vld [vmem:[%s7] sm:$0x1]
    %v542 = vlaneseq
    %v543 = vshrl.u32 %v542, 7
    %v544 = vsub.s32 0, %v543
    %v545 = vrot.slane %v540, %v544
    %vm547 = vcmask 64512
    %v549 = vsel %vm547, %v531, 0
    %v552 = vsel %vm547, %v532, 0
    %v555 = vsel %vm547, %v533, 0
    %v558 = vsel %vm547, %v534, 0
    %v561 = vsel %vm547, %v535, 0
    %v564 = vsel %vm547, %v536, 0
    %v567 = vsel %vm547, %v537, 0
    %v570 = vsel %vm547, %v538, 0
    %vm572 = vcmask 1043456
    %v574 = vsel %vm572, %v539, 0
    %576 = vmatprep.subr.bf16.mxu0 0
    %577 = vmatpush1.bf16.msra.mxu0 %v574
    %578 = vmatprep.subr.bf16.mxu0 0
    %579 = vmatpush1.bf16.msra.mxu0 0
    %580 = vmatprep.subr.bf16.mxu0 0
    %581 = vmatpush1.bf16.msra.mxu0 0
    %582 = vmatprep.subr.bf16.mxu0 0
    %583 = vmatpush1.bf16.msra.mxu0 0
    %584 = vmatprep.subr.bf16.mxu0 0
    %585 = vmatpush1.bf16.msra.mxu0 0
    %586 = vmatprep.subr.bf16.mxu0 0
    %587 = vmatpush1.bf16.msra.mxu0 0
    %588 = vmatprep.subr.bf16.mxu0 0
    %589 = vmatpush1.bf16.msra.mxu0 0
    %590 = vmatprep.subr.bf16.mxu0 0
    %591 = vmatpush1.bf16.msra.mxu0 0
    %592 = vmatprep.subr.bf16.mxu0 0
    %593 = vmatpush1.bf16.msra.mxu0 0
    %594 = vmatprep.subr.bf16.mxu0 0
    %595 = vmatpush1.bf16.msra.mxu0 0
    %596 = vmatprep.subr.bf16.mxu0 0
    %597 = vmatpush1.bf16.msra.mxu0 0
    %598 = vmatprep.subr.bf16.mxu0 0
    %599 = vmatpush1.bf16.msra.mxu0 0
    %600 = vmatprep.subr.bf16.mxu0 0
    %601 = vmatpush1.bf16.msra.mxu0 0
    %602 = vmatprep.subr.bf16.mxu0 0
    %603 = vmatpush1.bf16.msra.mxu0 0
    %604 = vmatprep.subr.bf16.mxu0 0
    %605 = vmatpush1.bf16.msra.mxu0 0
    %606 = vmatprep.subr.bf16.mxu0 0
    %607 = vmatpush1.bf16.msra.mxu0 0
    %608 = vmatprep.mubr.bf16.mxu0 0
    %609 = vmatmul.mubr.bf16.gmra.mrb[0].mxu0 %v549
    %v610 = vpop.f32.mrb[0].mxu0
    %v611 = vadd.f32 %v545, %v610
    %v612 = vpop.f32.mrb[0].mxu0
    %v613 = vpop.f32.mrb[0].mxu0
    %v614 = vadd.f32 %v545, %v613
    %v615 = vpop.f32.mrb[0].mxu0
    %616 = vmatprep.mubr.bf16.mxu0 0
    %617 = vmatmul.mubr.bf16.gmra.mrb[0].mxu0 %v552
    %v618 = vpop.f32.mrb[0].mxu0
    %v619 = vadd.f32 %v545, %v618
    %v620 = vpop.f32.mrb[0].mxu0
    %v621 = vpop.f32.mrb[0].mxu0
    %v622 = vadd.f32 %v545, %v621
    %v623 = vpop.f32.mrb[0].mxu0
    %624 = vmatprep.mubr.bf16.mxu0 0
    %625 = vmatmul.mubr.bf16.gmra.mrb[0].mxu0 %v555
    %v626 = vpop.f32.mrb[0].mxu0
    %v627 = vadd.f32 %v545, %v626
    %v628 = vpop.f32.mrb[0].mxu0
    %v629 = vpop.f32.mrb[0].mxu0
    %v630 = vadd.f32 %v545, %v629
    %v631 = vpop.f32.mrb[0].mxu0
    %632 = vmatprep.mubr.bf16.mxu0 0
    %633 = vmatmul.mubr.bf16.gmra.mrb[0].mxu0 %v558
    %v634 = vpop.f32.mrb[0].mxu0
    %v635 = vadd.f32 %v545, %v634
    %v636 = vpop.f32.mrb[0].mxu0
    %v637 = vpop.f32.mrb[0].mxu0
    %v638 = vadd.f32 %v545, %v637
    %v639 = vpop.f32.mrb[0].mxu0
    %640 = vmatprep.mubr.bf16.mxu0 0
    %641 = vmatmul.mubr.bf16.gmra.mrb[0].mxu0 %v561
    %v642 = vpop.f32.mrb[0].mxu0
    %v643 = vadd.f32 %v545, %v642
    %v644 = vpop.f32.mrb[0].mxu0
    %v645 = vpop.f32.mrb[0].mxu0
    %v646 = vadd.f32 %v545, %v645
    %v647 = vpop.f32.mrb[0].mxu0
    %648 = vmatprep.mubr.bf16.mxu0 0
    %649 = vmatmul.mubr.bf16.gmra.mrb[0].mxu0 %v564
    %v650 = vpop.f32.mrb[0].mxu0
    %v651 = vadd.f32 %v545, %v650
    %v652 = vpop.f32.mrb[0].mxu0
    %v653 = vpop.f32.mrb[0].mxu0
    %v654 = vadd.f32 %v545, %v653
    %v655 = vpop.f32.mrb[0].mxu0
    %656 = vmatprep.mubr.bf16.mxu0 0
    %657 = vmatmul.mubr.bf16.gmra.mrb[0].mxu0 %v567
    %v658 = vpop.f32.mrb[0].mxu0
    %v659 = vadd.f32 %v545, %v658
    %v660 = vpop.f32.mrb[0].mxu0
    %v661 = vpop.f32.mrb[0].mxu0
    %v662 = vadd.f32 %v545, %v661
    %v663 = vpop.f32.mrb[0].mxu0
    %664 = vmatprep.mubr.bf16.mxu0 0
    %665 = vmatmul.mubr.bf16.gmra.mrb[0].mxu0 %v570
    %v666 = vpop.f32.mrb[0].mxu0
    %v667 = vadd.f32 %v545, %v666
    %v668 = vpop.f32.mrb[0].mxu0
    %v669 = vpop.f32.mrb[0].mxu0
    %v670 = vadd.f32 %v545, %v669
    %v671 = vpop.f32.mrb[0].mxu0
    %672 = vdwg.mxu0
    %v673 = vsub.f32 0.0, %v611
    %v674 = vsub.f32 0.0, %v614
    %v675 = vsub.f32 0.0, %v619
    %v676 = vsub.f32 0.0, %v622
    %v677 = vsub.f32 0.0, %v627
    %v678 = vsub.f32 0.0, %v630
    %v679 = vsub.f32 0.0, %v635
    %v680 = vsub.f32 0.0, %v638
    %v681 = vsub.f32 0.0, %v643
    %v682 = vsub.f32 0.0, %v646
    %v683 = vsub.f32 0.0, %v651
    %v684 = vsub.f32 0.0, %v654
    %v685 = vsub.f32 0.0, %v659
    %v686 = vsub.f32 0.0, %v662
    %v687 = vsub.f32 0.0, %v667
    %v688 = vsub.f32 0.0, %v670
    %v689 = vmul.f32 %v673, 1.442695
    %v690 = vpow.pop %v689
    %v691 = vmul.f32 %v674, 1.442695
    %v692 = vpow.pop %v691
    %v693 = vmul.f32 %v675, 1.442695
    %v694 = vpow.pop %v693
    %v695 = vmul.f32 %v676, 1.442695
    %v696 = vpow.pop %v695
    %v697 = vmul.f32 %v677, 1.442695
    %v698 = vpow.pop %v697
    %v699 = vmul.f32 %v678, 1.442695
    %v700 = vpow.pop %v699
    %v701 = vmul.f32 %v679, 1.442695
    %v702 = vpow.pop %v701
    %v703 = vmul.f32 %v680, 1.442695
    %v704 = vpow.pop %v703
    %v705 = vmul.f32 %v681, 1.442695
    %v706 = vpow.pop %v705
    %v707 = vmul.f32 %v682, 1.442695
    %v708 = vpow.pop %v707
    %v709 = vmul.f32 %v683, 1.442695
    %v710 = vpow.pop %v709
    %v711 = vmul.f32 %v684, 1.442695
    %v712 = vpow.pop %v711
    %v713 = vmul.f32 %v685, 1.442695
    %v714 = vpow.pop %v713
    %v715 = vmul.f32 %v686, 1.442695
    %v716 = vpow.pop %v715
    %v717 = vmul.f32 %v687, 1.442695
    %v718 = vpow.pop %v717
    %v719 = vmul.f32 %v688, 1.442695
    %v720 = vpow.pop %v719
    %v721 = vadd.f32 %v690, 1.0
    %v722 = vadd.f32 %v692, 1.0
    %v723 = vadd.f32 %v694, 1.0
    %v724 = vadd.f32 %v696, 1.0
    %v725 = vadd.f32 %v698, 1.0
    %v726 = vadd.f32 %v700, 1.0
    %v727 = vadd.f32 %v702, 1.0
    %v728 = vadd.f32 %v704, 1.0
    %v729 = vadd.f32 %v706, 1.0
    %v730 = vadd.f32 %v708, 1.0
    %v731 = vadd.f32 %v710, 1.0
    %v732 = vadd.f32 %v712, 1.0
    %v733 = vadd.f32 %v714, 1.0
    %v734 = vadd.f32 %v716, 1.0
    %v735 = vadd.f32 %v718, 1.0
    %v736 = vadd.f32 %v720, 1.0
    %v737 = vrcp.pop %v721
    %v738 = vmul.f32 1.0, %v737
    %v739 = vrcp.pop %v722
    %v740 = vmul.f32 1.0, %v739
    %v741 = vrcp.pop %v723
    %v742 = vmul.f32 1.0, %v741
    %v743 = vrcp.pop %v724
    %v744 = vmul.f32 1.0, %v743
    %v745 = vrcp.pop %v725
    %v746 = vmul.f32 1.0, %v745
    %v747 = vrcp.pop %v726
    %v748 = vmul.f32 1.0, %v747
    %v749 = vrcp.pop %v727
    %v750 = vmul.f32 1.0, %v749
    %v751 = vrcp.pop %v728
    %v752 = vmul.f32 1.0, %v751
    %v753 = vrcp.pop %v729
    %v754 = vmul.f32 1.0, %v753
    %v755 = vrcp.pop %v730
    %v756 = vmul.f32 1.0, %v755
    %v757 = vrcp.pop %v731
    %v758 = vmul.f32 1.0, %v757
    %v759 = vrcp.pop %v732
    %v760 = vmul.f32 1.0, %v759
    %v761 = vrcp.pop %v733
    %v762 = vmul.f32 1.0, %v761
    %v763 = vrcp.pop %v734
    %v764 = vmul.f32 1.0, %v763
    %v765 = vrcp.pop %v735
    %v766 = vmul.f32 1.0, %v765
    %v767 = vrcp.pop %v736
    %v768 = vmul.f32 1.0, %v767
    %v769 = vsel %vm393, %v354, 0.0
    %v770 = vsel %vm393, %v355, 0.0
    %v771 = vadd.f32 %v769, %v770
    %v772 = vsel %vm393, %v356, 0.0
    %v773 = vadd.f32 %v771, %v772
    %v774 = vsel %vm393, %v357, 0.0
    %v775 = vadd.f32 %v773, %v774
    %v776 = vsel %vm393, %v358, 0.0
    %v777 = vadd.f32 %v775, %v776
    %v778 = vsel %vm393, %v359, 0.0
    %v779 = vadd.f32 %v777, %v778
    %v780 = vsel %vm393, %v360, 0.0
    %v781 = vadd.f32 %v779, %v780
    %v782 = vsel %vm393, %v361, 0.0
    %v783 = vadd.f32 %v781, %v782
    %v784 = vrot.slane %v783, 4
    %v785 = vadd.f32 %v783, %v784
    %v786 = vrot.slane %v785, 2
    %v787 = vadd.f32 %v785, %v786
    %v788 = vrot.slane %v787, 1
    %v789 = vadd.f32 %v787, %v788
    %v790 = vsel %vm393, %v362, 0.0
    %v791 = vsel %vm393, %v363, 0.0
    %v792 = vadd.f32 %v790, %v791
    %v793 = vsel %vm393, %v364, 0.0
    %v794 = vadd.f32 %v792, %v793
    %v795 = vsel %vm393, %v365, 0.0
    %v796 = vadd.f32 %v794, %v795
    %v797 = vsel %vm393, %v366, 0.0
    %v798 = vadd.f32 %v796, %v797
    %v799 = vsel %vm393, %v367, 0.0
    %v800 = vadd.f32 %v798, %v799
    %v801 = vsel %vm393, %v368, 0.0
    %v802 = vadd.f32 %v800, %v801
    %v803 = vsel %vm393, %v369, 0.0
    %v804 = vadd.f32 %v802, %v803
    %v805 = vrot.slane %v804, 4
    %v806 = vadd.f32 %v804, %v805
    %v807 = vrot.slane %v806, 2
    %v808 = vadd.f32 %v806, %v807
    %v809 = vrot.slane %v808, 1
    %v810 = vadd.f32 %v808, %v809
    %v811 = vmul.f32 %v789, 0.015625
    %v812 = vmul.f32 %v810, 0.015625
    %v813 = vld [vmem:[%s8] sm:$0xff]
    %v814 = vld [vmem:[%s8 + $0x8] sm:$0xff]
    %v815 = vld [vmem:[%s8 + $0x10] sm:$0xff]
    %v816 = vld [vmem:[%s8 + $0x18] sm:$0xff]
    %818 = vbcast.lane.b32.xlu0 %v811, 256
    %v819 = vpop.permute.xlu0 %818
    %s821 = sor.u32 256, 8
    %822 = vbcast.lane.b32.xlu0 %v811, %s821
    %v823 = vpop.permute.xlu0 %822
    %s825 = sor.u32 256, 16
    %826 = vbcast.lane.b32.xlu0 %v811, %s825
    %v827 = vpop.permute.xlu0 %826
    %s829 = sor.u32 256, 24
    %830 = vbcast.lane.b32.xlu0 %v811, %s829
    %v831 = vpop.permute.xlu0 %830
    %833 = vbcast.lane.b32.xlu0 %v812, 256
    %v834 = vpop.permute.xlu0 %833
    %s836 = sor.u32 256, 8
    %837 = vbcast.lane.b32.xlu0 %v812, %s836
    %v838 = vpop.permute.xlu0 %837
    %s840 = sor.u32 256, 16
    %841 = vbcast.lane.b32.xlu0 %v812, %s840
    %v842 = vpop.permute.xlu0 %841
    %s844 = sor.u32 256, 24
    %845 = vbcast.lane.b32.xlu0 %v812, %s844
    %v846 = vpop.permute.xlu0 %845
    %v847 = vmul.f32 %v819, %v813
    %v848 = vmul.f32 %v823, %v814
    %v849 = vmul.f32 %v827, %v815
    %v850 = vmul.f32 %v831, %v816
    %v851 = vmul.f32 %v834, %v813
    %v852 = vmul.f32 %v838, %v814
    %v853 = vmul.f32 %v842, %v815
    %v854 = vmul.f32 %v846, %v816
    %v855 = vsel %vm547, %v847, 0.0
    %v856 = vsel %vm547, %v848, 0.0
    %v857 = vadd.f32 %v855, %v856
    %v858 = vsel %vm547, %v849, 0.0
    %v859 = vadd.f32 %v857, %v858
    %v860 = vsel %vm547, %v850, 0.0
    %v861 = vadd.f32 %v859, %v860
    %v862 = vrot.slane %v861, 4
    %v863 = vadd.f32 %v861, %v862
    %v864 = vrot.slane %v863, 2
    %v865 = vadd.f32 %v863, %v864
    %v866 = vrot.slane %v865, 1
    %v867 = vadd.f32 %v865, %v866
    %v868 = vsel %vm547, %v851, 0.0
    %v869 = vsel %vm547, %v852, 0.0
    %v870 = vadd.f32 %v868, %v869
    %v871 = vsel %vm547, %v853, 0.0
    %v872 = vadd.f32 %v870, %v871
    %v873 = vsel %vm547, %v854, 0.0
    %v874 = vadd.f32 %v872, %v873
    %v875 = vrot.slane %v874, 4
    %v876 = vadd.f32 %v874, %v875
    %v877 = vrot.slane %v876, 2
    %v878 = vadd.f32 %v876, %v877
    %v879 = vrot.slane %v878, 1
    %v880 = vadd.f32 %v878, %v879
    %v881 = vld [vmem:[%s9] sm:$0x1]
    %v883 = vlaneseq
    %v884 = vshrl.u32 %v883, 7
    %v885 = vsub.s32 0, %v884
    %v886 = vrot.slane %v881, %v885
    %v888 = vadd.f32 %v867, %v886
    %v889 = vadd.f32 %v880, %v886
    %v890 = vmax.f32 %v888, 0.0
    %v891 = vmax.f32 %v889, 0.0
    %v892 = vld [vmem:[%s10] sm:$0xff]
    %v893 = vlaneseq
    %v894 = vshrl.u32 %v893, 7
    %v895 = vsub.s32 0, %v894
    %v896 = vrot.slane %v890, %v895
    %898 = vbcast.lane.b32.xlu0 %v896, 256
    %v899 = vpop.permute.xlu0 %898
    %v900 = vlaneseq
    %v901 = vshrl.u32 %v900, 7
    %v902 = vsub.s32 0, %v901
    %v903 = vrot.slane %v891, %v902
    %905 = vbcast.lane.b32.xlu0 %v903, 256
    %v906 = vpop.permute.xlu0 %905
    %v907 = vmul.f32 %v899, %v892
    %v908 = vmul.f32 %v906, %v892
    %v909 = vsel %vm393, %v907, 0.0
    %v910 = vrot.slane %v909, 4
    %v911 = vadd.f32 %v909, %v910
    %v912 = vrot.slane %v911, 2
    %v913 = vadd.f32 %v911, %v912
    %v914 = vrot.slane %v913, 1
    %v915 = vadd.f32 %v913, %v914
    %v916 = vsel %vm393, %v908, 0.0
    %v917 = vrot.slane %v916, 4
    %v918 = vadd.f32 %v916, %v917
    %v919 = vrot.slane %v918, 2
    %v920 = vadd.f32 %v918, %v919
    %v921 = vrot.slane %v920, 1
    %v922 = vadd.f32 %v920, %v921
    %v923 = vld [vmem:[%s11] sm:$0x1]
    %v925 = vlaneseq
    %v926 = vshrl.u32 %v925, 7
    %v927 = vsub.s32 0, %v926
    %v928 = vrot.slane %v923, %v927
    %v930 = vadd.f32 %v915, %v928
    %v931 = vadd.f32 %v922, %v928
    %v932 = vsub.f32 0.0, %v930
    %v933 = vsub.f32 0.0, %v931
    %v934 = vmul.f32 %v932, 1.442695
    %v935 = vpow.pop %v934
    %v936 = vmul.f32 %v933, 1.442695
    %v937 = vpow.pop %v936
    %v938 = vadd.f32 %v935, 1.0
    %v939 = vadd.f32 %v937, 1.0
    %v940 = vrcp.pop %v938
    %v941 = vmul.f32 1.0, %v940
    %v942 = vrcp.pop %v939
    %v943 = vmul.f32 1.0, %v942
    %v944 = vadd.f32 %v153, %v354
    %v945 = vadd.f32 %v154, %v355
    %v946 = vadd.f32 %v155, %v356
    %v947 = vadd.f32 %v156, %v357
    %v948 = vadd.f32 %v157, %v358
    %v949 = vadd.f32 %v158, %v359
    %v950 = vadd.f32 %v159, %v360
    %v951 = vadd.f32 %v160, %v361
    %v952 = vadd.f32 %v185, %v362
    %v953 = vadd.f32 %v186, %v363
    %v954 = vadd.f32 %v187, %v364
    %v955 = vadd.f32 %v188, %v365
    %v956 = vadd.f32 %v189, %v366
    %v957 = vadd.f32 %v190, %v367
    %v958 = vadd.f32 %v191, %v368
    %v959 = vadd.f32 %v192, %v369
    %v975 = vrot.slane 0.0, 7
    %v976 = vrot.slane %v944, 7
    %v977 = vrot.slane %v945, 7
    %v978 = vrot.slane %v946, 7
    %v979 = vrot.slane %v947, 7
    %v980 = vrot.slane %v948, 7
    %v981 = vrot.slane %v949, 7
    %v982 = vrot.slane %v950, 7
    %v983 = vrot.slane %v952, 7
    %v984 = vrot.slane %v953, 7
    %v985 = vrot.slane %v954, 7
    %v986 = vrot.slane %v955, 7
    %v987 = vrot.slane %v956, 7
    %v988 = vrot.slane %v957, 7
    %v989 = vrot.slane %v958, 7
    %vm1005 = vcmask 1040384
    %v1006 = vsel %vm1005, 0.0, %v975
    %v1007 = vsel %vm1005, 0.0, %v976
    %v1008 = vsel %vm1005, 0.0, %v977
    %v1009 = vsel %vm1005, 0.0, %v978
    %v1010 = vsel %vm1005, 0.0, %v979
    %v1011 = vsel %vm1005, 0.0, %v980
    %v1012 = vsel %vm1005, 0.0, %v981
    %v1013 = vsel %vm1005, 0.0, %v982
    %v1014 = vsel %vm1005, 0.0, %v983
    %v1015 = vsel %vm1005, 0.0, %v984
    %v1016 = vsel %vm1005, 0.0, %v985
    %v1017 = vsel %vm1005, 0.0, %v986
    %v1018 = vsel %vm1005, 0.0, %v987
    %v1019 = vsel %vm1005, 0.0, %v988
    %v1020 = vsel %vm1005, 0.0, %v989
    %v1021 = vrot.slane 0.0, 1
    %v1022 = vrot.slane %v944, 1
    %v1023 = vrot.slane %v945, 1
    %v1024 = vrot.slane %v946, 1
    %v1025 = vrot.slane %v947, 1
    %v1026 = vrot.slane %v948, 1
    %v1027 = vrot.slane %v949, 1
    %v1028 = vrot.slane %v950, 1
    %v1029 = vrot.slane %v952, 1
    %v1030 = vrot.slane %v953, 1
    %v1031 = vrot.slane %v954, 1
    %v1032 = vrot.slane %v955, 1
    %v1033 = vrot.slane %v956, 1
    %v1034 = vrot.slane %v957, 1
    %v1035 = vrot.slane %v958, 1
    %vm1051 = vcmask 1046528
    %v1052 = vsel %vm1051, %v1021, 0.0
    %v1053 = vsel %vm1051, %v1022, 0.0
    %v1054 = vsel %vm1051, %v1023, 0.0
    %v1055 = vsel %vm1051, %v1024, 0.0
    %v1056 = vsel %vm1051, %v1025, 0.0
    %v1057 = vsel %vm1051, %v1026, 0.0
    %v1058 = vsel %vm1051, %v1027, 0.0
    %v1059 = vsel %vm1051, %v1028, 0.0
    %v1060 = vsel %vm1051, %v1029, 0.0
    %v1061 = vsel %vm1051, %v1030, 0.0
    %v1062 = vsel %vm1051, %v1031, 0.0
    %v1063 = vsel %vm1051, %v1032, 0.0
    %v1064 = vsel %vm1051, %v1033, 0.0
    %v1065 = vsel %vm1051, %v1034, 0.0
    %v1066 = vsel %vm1051, %v1035, 0.0
    %v1069 = vrot.slane %v951, 7
    %v1070 = vrot.slane %v959, 7
    %v1073 = vsel %vm1005, 0.0, %v1069
    %v1074 = vsel %vm1005, 0.0, %v1070
    %v1075 = vrot.slane %v951, 1
    %v1076 = vrot.slane %v959, 1
    %v1079 = vsel %vm1051, %v1075, 0.0
    %v1080 = vsel %vm1051, %v1076, 0.0
    %1081 = vrot.lane.b32.xlu0 0.0, 32
    %v1082 = vpop.permute.xlu0 %1081
    %1083 = vrot.lane.b32.xlu0 %v944, 32
    %v1084 = vpop.permute.xlu0 %1083
    %1085 = vrot.lane.b32.xlu0 %v945, 32
    %v1086 = vpop.permute.xlu0 %1085
    %1087 = vrot.lane.b32.xlu0 %v946, 32
    %v1088 = vpop.permute.xlu0 %1087
    %1089 = vrot.lane.b32.xlu0 %v947, 32
    %v1090 = vpop.permute.xlu0 %1089
    %1091 = vrot.lane.b32.xlu0 %v948, 32
    %v1092 = vpop.permute.xlu0 %1091
    %1093 = vrot.lane.b32.xlu0 %v949, 32
    %v1094 = vpop.permute.xlu0 %1093
    %1095 = vrot.lane.b32.xlu0 %v950, 32
    %v1096 = vpop.permute.xlu0 %1095
    %1097 = vrot.lane.b32.xlu0 %v952, 32
    %v1098 = vpop.permute.xlu0 %1097
    %1099 = vrot.lane.b32.xlu0 %v953, 32
    %v1100 = vpop.permute.xlu0 %1099
    %1101 = vrot.lane.b32.xlu0 %v954, 32
    %v1102 = vpop.permute.xlu0 %1101
    %1103 = vrot.lane.b32.xlu0 %v955, 32
    %v1104 = vpop.permute.xlu0 %1103
    %1105 = vrot.lane.b32.xlu0 %v956, 32
    %v1106 = vpop.permute.xlu0 %1105
    %1107 = vrot.lane.b32.xlu0 %v957, 32
    %v1108 = vpop.permute.xlu0 %1107
    %1109 = vrot.lane.b32.xlu0 %v958, 32
    %v1110 = vpop.permute.xlu0 %1109
    %1141 = vrot.lane.b32.xlu0 %v1052, 64
    %v1142 = vpop.permute.xlu0 %1141
    %1143 = vrot.lane.b32.xlu0 %v1053, 64
    %v1144 = vpop.permute.xlu0 %1143
    %1145 = vrot.lane.b32.xlu0 %v1054, 64
    %v1146 = vpop.permute.xlu0 %1145
    %1147 = vrot.lane.b32.xlu0 %v1055, 64
    %v1148 = vpop.permute.xlu0 %1147
    %1149 = vrot.lane.b32.xlu0 %v1056, 64
    %v1150 = vpop.permute.xlu0 %1149
    %1151 = vrot.lane.b32.xlu0 %v1057, 64
    %v1152 = vpop.permute.xlu0 %1151
    %1153 = vrot.lane.b32.xlu0 %v1058, 64
    %v1154 = vpop.permute.xlu0 %1153
    %1155 = vrot.lane.b32.xlu0 %v1059, 64
    %v1156 = vpop.permute.xlu0 %1155
    %1157 = vrot.lane.b32.xlu0 %v1060, 64
    %v1158 = vpop.permute.xlu0 %1157
    %1159 = vrot.lane.b32.xlu0 %v1061, 64
    %v1160 = vpop.permute.xlu0 %1159
    %1161 = vrot.lane.b32.xlu0 %v1062, 64
    %v1162 = vpop.permute.xlu0 %1161
    %1163 = vrot.lane.b32.xlu0 %v1063, 64
    %v1164 = vpop.permute.xlu0 %1163
    %1165 = vrot.lane.b32.xlu0 %v1064, 64
    %v1166 = vpop.permute.xlu0 %1165
    %1167 = vrot.lane.b32.xlu0 %v1065, 64
    %v1168 = vpop.permute.xlu0 %1167
    %1169 = vrot.lane.b32.xlu0 %v1066, 64
    %v1170 = vpop.permute.xlu0 %1169
    %1202 = vrot.lane.b32.xlu0 %v1007, 96
    %v1203 = vpop.permute.xlu0 %1202
    %1204 = vrot.lane.b32.xlu0 %v1008, 96
    %v1205 = vpop.permute.xlu0 %1204
    %1206 = vrot.lane.b32.xlu0 %v1009, 96
    %v1207 = vpop.permute.xlu0 %1206
    %1208 = vrot.lane.b32.xlu0 %v1010, 96
    %v1209 = vpop.permute.xlu0 %1208
    %1210 = vrot.lane.b32.xlu0 %v1011, 96
    %v1211 = vpop.permute.xlu0 %1210
    %1212 = vrot.lane.b32.xlu0 %v1012, 96
    %v1213 = vpop.permute.xlu0 %1212
    %1214 = vrot.lane.b32.xlu0 %v1013, 96
    %v1215 = vpop.permute.xlu0 %1214
    %1216 = vrot.lane.b32.xlu0 %v1073, 96
    %v1217 = vpop.permute.xlu0 %1216
    %1218 = vrot.lane.b32.xlu0 %v1014, 96
    %v1219 = vpop.permute.xlu0 %1218
    %1220 = vrot.lane.b32.xlu0 %v1015, 96
    %v1221 = vpop.permute.xlu0 %1220
    %1222 = vrot.lane.b32.xlu0 %v1016, 96
    %v1223 = vpop.permute.xlu0 %1222
    %1224 = vrot.lane.b32.xlu0 %v1017, 96
    %v1225 = vpop.permute.xlu0 %1224
    %1226 = vrot.lane.b32.xlu0 %v1018, 96
    %v1227 = vpop.permute.xlu0 %1226
    %1228 = vrot.lane.b32.xlu0 %v1019, 96
    %v1229 = vpop.permute.xlu0 %1228
    %1230 = vrot.lane.b32.xlu0 %v1020, 96
    %v1231 = vpop.permute.xlu0 %1230
    %1232 = vrot.lane.b32.xlu0 %v1074, 96
    %v1233 = vpop.permute.xlu0 %1232
    %1252 = vrot.lane.b32.xlu0 %v1053, 32
    %v1253 = vpop.permute.xlu0 %1252
    %1254 = vrot.lane.b32.xlu0 %v1054, 32
    %v1255 = vpop.permute.xlu0 %1254
    %1256 = vrot.lane.b32.xlu0 %v1055, 32
    %v1257 = vpop.permute.xlu0 %1256
    %1258 = vrot.lane.b32.xlu0 %v1056, 32
    %v1259 = vpop.permute.xlu0 %1258
    %1260 = vrot.lane.b32.xlu0 %v1057, 32
    %v1261 = vpop.permute.xlu0 %1260
    %1262 = vrot.lane.b32.xlu0 %v1058, 32
    %v1263 = vpop.permute.xlu0 %1262
    %1264 = vrot.lane.b32.xlu0 %v1059, 32
    %v1265 = vpop.permute.xlu0 %1264
    %1266 = vrot.lane.b32.xlu0 %v1079, 32
    %v1267 = vpop.permute.xlu0 %1266
    %1268 = vrot.lane.b32.xlu0 %v1060, 32
    %v1269 = vpop.permute.xlu0 %1268
    %1270 = vrot.lane.b32.xlu0 %v1061, 32
    %v1271 = vpop.permute.xlu0 %1270
    %1272 = vrot.lane.b32.xlu0 %v1062, 32
    %v1273 = vpop.permute.xlu0 %1272
    %1274 = vrot.lane.b32.xlu0 %v1063, 32
    %v1275 = vpop.permute.xlu0 %1274
    %1276 = vrot.lane.b32.xlu0 %v1064, 32
    %v1277 = vpop.permute.xlu0 %1276
    %1278 = vrot.lane.b32.xlu0 %v1065, 32
    %v1279 = vpop.permute.xlu0 %1278
    %1280 = vrot.lane.b32.xlu0 %v1066, 32
    %v1281 = vpop.permute.xlu0 %1280
    %1282 = vrot.lane.b32.xlu0 %v1080, 32
    %v1283 = vpop.permute.xlu0 %1282
    %1301 = vrot.lane.b32.xlu0 %v1008, 64
    %v1302 = vpop.permute.xlu0 %1301
    %1303 = vrot.lane.b32.xlu0 %v1009, 64
    %v1304 = vpop.permute.xlu0 %1303
    %1305 = vrot.lane.b32.xlu0 %v1010, 64
    %v1306 = vpop.permute.xlu0 %1305
    %1307 = vrot.lane.b32.xlu0 %v1011, 64
    %v1308 = vpop.permute.xlu0 %1307
    %1309 = vrot.lane.b32.xlu0 %v1012, 64
    %v1310 = vpop.permute.xlu0 %1309
    %1311 = vrot.lane.b32.xlu0 %v1013, 64
    %v1312 = vpop.permute.xlu0 %1311
    %1313 = vrot.lane.b32.xlu0 %v1073, 64
    %v1314 = vpop.permute.xlu0 %1313
    %1315 = vrot.lane.b32.xlu0 %v1006, 64
    %v1316 = vpop.permute.xlu0 %1315
    %1317 = vrot.lane.b32.xlu0 %v1015, 64
    %v1318 = vpop.permute.xlu0 %1317
    %1319 = vrot.lane.b32.xlu0 %v1016, 64
    %v1320 = vpop.permute.xlu0 %1319
    %1321 = vrot.lane.b32.xlu0 %v1017, 64
    %v1322 = vpop.permute.xlu0 %1321
    %1323 = vrot.lane.b32.xlu0 %v1018, 64
    %v1324 = vpop.permute.xlu0 %1323
    %1325 = vrot.lane.b32.xlu0 %v1019, 64
    %v1326 = vpop.permute.xlu0 %1325
    %1327 = vrot.lane.b32.xlu0 %v1020, 64
    %v1328 = vpop.permute.xlu0 %1327
    %1329 = vrot.lane.b32.xlu0 %v1074, 64
    %v1330 = vpop.permute.xlu0 %1329
    %1346 = vrot.lane.b32.xlu0 %v945, 96
    %v1347 = vpop.permute.xlu0 %1346
    %1348 = vrot.lane.b32.xlu0 %v946, 96
    %v1349 = vpop.permute.xlu0 %1348
    %1350 = vrot.lane.b32.xlu0 %v947, 96
    %v1351 = vpop.permute.xlu0 %1350
    %1352 = vrot.lane.b32.xlu0 %v948, 96
    %v1353 = vpop.permute.xlu0 %1352
    %1354 = vrot.lane.b32.xlu0 %v949, 96
    %v1355 = vpop.permute.xlu0 %1354
    %1356 = vrot.lane.b32.xlu0 %v950, 96
    %v1357 = vpop.permute.xlu0 %1356
    %1358 = vrot.lane.b32.xlu0 %v951, 96
    %v1359 = vpop.permute.xlu0 %1358
    %1360 = vrot.lane.b32.xlu0 0.0, 96
    %v1361 = vpop.permute.xlu0 %1360
    %1362 = vrot.lane.b32.xlu0 %v953, 96
    %v1363 = vpop.permute.xlu0 %1362
    %1364 = vrot.lane.b32.xlu0 %v954, 96
    %v1365 = vpop.permute.xlu0 %1364
    %1366 = vrot.lane.b32.xlu0 %v955, 96
    %v1367 = vpop.permute.xlu0 %1366
    %1368 = vrot.lane.b32.xlu0 %v956, 96
    %v1369 = vpop.permute.xlu0 %1368
    %1370 = vrot.lane.b32.xlu0 %v957, 96
    %v1371 = vpop.permute.xlu0 %1370
    %1372 = vrot.lane.b32.xlu0 %v958, 96
    %v1373 = vpop.permute.xlu0 %1372
    %1374 = vrot.lane.b32.xlu0 %v959, 96
    %v1375 = vpop.permute.xlu0 %1374
    %v1391 = vsel %vm393, %v1006, %v1082
    %v1392 = vsel %vm393, %v1007, %v1084
    %v1393 = vsel %vm393, %v1008, %v1086
    %v1394 = vsel %vm393, %v1009, %v1088
    %v1395 = vsel %vm393, %v1010, %v1090
    %v1396 = vsel %vm393, %v1011, %v1092
    %v1397 = vsel %vm393, %v1012, %v1094
    %v1398 = vsel %vm393, %v1013, %v1096
    %v1399 = vsel %vm393, %v1014, %v1098
    %v1400 = vsel %vm393, %v1015, %v1100
    %v1401 = vsel %vm393, %v1016, %v1102
    %v1402 = vsel %vm393, %v1017, %v1104
    %v1403 = vsel %vm393, %v1018, %v1106
    %v1404 = vsel %vm393, %v1019, %v1108
    %v1405 = vsel %vm393, %v1020, %v1110
    %vm1406 = vcmask 523264
    %v1407 = vsel %vm1406, %v1391, %v1142
    %v1408 = vsel %vm1406, %v1392, %v1144
    %v1409 = vsel %vm1406, %v1393, %v1146
    %v1410 = vsel %vm1406, %v1394, %v1148
    %v1411 = vsel %vm1406, %v1395, %v1150
    %v1412 = vsel %vm1406, %v1396, %v1152
    %v1413 = vsel %vm1406, %v1397, %v1154
    %v1414 = vsel %vm1406, %v1398, %v1156
    %v1415 = vsel %vm1406, %v1399, %v1158
    %v1416 = vsel %vm1406, %v1400, %v1160
    %v1417 = vsel %vm1406, %v1401, %v1162
    %v1418 = vsel %vm1406, %v1402, %v1164
    %v1419 = vsel %vm1406, %v1403, %v1166
    %v1420 = vsel %vm1406, %v1404, %v1168
    %v1421 = vsel %vm1406, %v1405, %v1170
    %vm1422 = vcmask 785408
    %v1423 = vsel %vm1422, %v1407, %v1203
    %v1424 = vsel %vm1422, %v1408, %v1205
    %v1425 = vsel %vm1422, %v1409, %v1207
    %v1426 = vsel %vm1422, %v1410, %v1209
    %v1427 = vsel %vm1422, %v1411, %v1211
    %v1428 = vsel %vm1422, %v1412, %v1213
    %v1429 = vsel %vm1422, %v1413, %v1215
    %v1430 = vsel %vm1422, %v1414, %v1217
    %v1431 = vsel %vm1422, %v1407, %v1219
    %v1432 = vsel %vm1422, %v1415, %v1221
    %v1433 = vsel %vm1422, %v1416, %v1223
    %v1434 = vsel %vm1422, %v1417, %v1225
    %v1435 = vsel %vm1422, %v1418, %v1227
    %v1436 = vsel %vm1422, %v1419, %v1229
    %v1437 = vsel %vm1422, %v1420, %v1231
    %v1438 = vsel %vm1422, %v1421, %v1233
    %v1439 = vsel %vm393, %v944, %v1253
    %v1440 = vsel %vm393, %v945, %v1255
    %v1441 = vsel %vm393, %v946, %v1257
    %v1442 = vsel %vm393, %v947, %v1259
    %v1443 = vsel %vm393, %v948, %v1261
    %v1444 = vsel %vm393, %v949, %v1263
    %v1445 = vsel %vm393, %v950, %v1265
    %v1446 = vsel %vm393, %v951, %v1267
    %v1447 = vsel %vm393, %v952, %v1269
    %v1448 = vsel %vm393, %v953, %v1271
    %v1449 = vsel %vm393, %v954, %v1273
    %v1450 = vsel %vm393, %v955, %v1275
    %v1451 = vsel %vm393, %v956, %v1277
    %v1452 = vsel %vm393, %v957, %v1279
    %v1453 = vsel %vm393, %v958, %v1281
    %v1454 = vsel %vm393, %v959, %v1283
    %v1455 = vsel %vm1406, %v1439, %v1302
    %v1456 = vsel %vm1406, %v1440, %v1304
    %v1457 = vsel %vm1406, %v1441, %v1306
    %v1458 = vsel %vm1406, %v1442, %v1308
    %v1459 = vsel %vm1406, %v1443, %v1310
    %v1460 = vsel %vm1406, %v1444, %v1312
    %v1461 = vsel %vm1406, %v1445, %v1314
    %v1462 = vsel %vm1406, %v1446, %v1316
    %v1463 = vsel %vm1406, %v1447, %v1318
    %v1464 = vsel %vm1406, %v1448, %v1320
    %v1465 = vsel %vm1406, %v1449, %v1322
    %v1466 = vsel %vm1406, %v1450, %v1324
    %v1467 = vsel %vm1406, %v1451, %v1326
    %v1468 = vsel %vm1406, %v1452, %v1328
    %v1469 = vsel %vm1406, %v1453, %v1330
    %v1470 = vsel %vm1406, %v1454, %v1316
    %v1471 = vsel %vm1422, %v1455, %v1347
    %v1472 = vsel %vm1422, %v1456, %v1349
    %v1473 = vsel %vm1422, %v1457, %v1351
    %v1474 = vsel %vm1422, %v1458, %v1353
    %v1475 = vsel %vm1422, %v1459, %v1355
    %v1476 = vsel %vm1422, %v1460, %v1357
    %v1477 = vsel %vm1422, %v1461, %v1359
    %v1478 = vsel %vm1422, %v1462, %v1361
    %v1479 = vsel %vm1422, %v1463, %v1363
    %v1480 = vsel %vm1422, %v1464, %v1365
    %v1481 = vsel %vm1422, %v1465, %v1367
    %v1482 = vsel %vm1422, %v1466, %v1369
    %v1483 = vsel %vm1422, %v1467, %v1371
    %v1484 = vsel %vm1422, %v1468, %v1373
    %v1485 = vsel %vm1422, %v1469, %v1375
    %v1486 = vsel %vm1422, %v1470, %v1361
    %v1487 = vpack.c.bf16 %v1424, %v1423
    %v1488 = vpack.c.bf16 %v1472, %v1471
    %v1489 = vpack.c.bf16 %v1055, %v1054
    %v1490 = vpack.c.bf16 %v1426, %v1425
    %v1491 = vpack.c.bf16 %v1474, %v1473
    %v1492 = vpack.c.bf16 %v1057, %v1056
    %v1493 = vpack.c.bf16 %v1428, %v1427
    %v1494 = vpack.c.bf16 %v1476, %v1475
    %v1495 = vpack.c.bf16 %v1059, %v1058
    %v1496 = vpack.c.bf16 %v1430, %v1429
    %v1497 = vpack.c.bf16 %v1478, %v1477
    %v1498 = vpack.c.bf16 %v1052, %v1079
    %v1499 = vpack.c.bf16 %v1432, %v1431
    %v1500 = vpack.c.bf16 %v1480, %v1479
    %v1501 = vpack.c.bf16 %v1062, %v1061
    %v1502 = vpack.c.bf16 %v1434, %v1433
    %v1503 = vpack.c.bf16 %v1482, %v1481
    %v1504 = vpack.c.bf16 %v1064, %v1063
    %v1505 = vpack.c.bf16 %v1436, %v1435
    %v1506 = vpack.c.bf16 %v1484, %v1483
    %v1507 = vpack.c.bf16 %v1066, %v1065
    %v1508 = vpack.c.bf16 %v1438, %v1437
    %v1509 = vpack.c.bf16 %v1486, %v1485
    %v1510 = vpack.c.bf16 %v1052, %v1080
    %v1511 = vld [vmem:[%s12] sm:$0xf]
    %v1512 = vld [vmem:[%s12 + $0x4] sm:$0xf]
    %v1513 = vld [vmem:[%s12 + $0x8] sm:$0xf]
    %v1514 = vld [vmem:[%s12 + $0xc] sm:$0xf]
    %v1515 = vld [vmem:[%s12 + $0x10] sm:$0xf]
    %v1516 = vld [vmem:[%s12 + $0x14] sm:$0xf]
    %v1517 = vld [vmem:[%s12 + $0x18] sm:$0xf]
    %v1518 = vld [vmem:[%s12 + $0x1c] sm:$0xf]
    %v1519 = vld [vmem:[%s12 + $0x20] sm:$0xf]
    %v1520 = vld [vmem:[%s12 + $0x24] sm:$0xf]
    %v1521 = vld [vmem:[%s12 + $0x28] sm:$0xf]
    %v1522 = vld [vmem:[%s12 + $0x2c] sm:$0xf]
    %v1523 = vld [vmem:[%s12 + $0x30] sm:$0xf]
    %v1524 = vld [vmem:[%s12 + $0x34] sm:$0xf]
    %v1525 = vld [vmem:[%s12 + $0x38] sm:$0xf]
    %v1526 = vld [vmem:[%s12 + $0x3c] sm:$0xf]
    %v1527 = vld [vmem:[%s12 + $0x40] sm:$0xf]
    %v1528 = vld [vmem:[%s12 + $0x44] sm:$0xf]
    %v1529 = vld [vmem:[%s12 + $0x48] sm:$0xf]
    %v1530 = vld [vmem:[%s12 + $0x4c] sm:$0xf]
    %v1531 = vld [vmem:[%s12 + $0x50] sm:$0xf]
    %v1532 = vld [vmem:[%s12 + $0x54] sm:$0xf]
    %v1533 = vld [vmem:[%s12 + $0x58] sm:$0xf]
    %v1534 = vld [vmem:[%s12 + $0x5c] sm:$0xf]
    %v1535 = vld [vmem:[%s12 + $0x60] sm:$0xf]
    %v1536 = vld [vmem:[%s12 + $0x64] sm:$0xf]
    %v1537 = vld [vmem:[%s12 + $0x68] sm:$0xf]
    %v1538 = vld [vmem:[%s12 + $0x6c] sm:$0xf]
    %v1539 = vld [vmem:[%s12 + $0x70] sm:$0xf]
    %v1540 = vld [vmem:[%s12 + $0x74] sm:$0xf]
    %v1541 = vld [vmem:[%s12 + $0x78] sm:$0xf]
    %v1542 = vld [vmem:[%s12 + $0x7c] sm:$0xf]
    %v1543 = vld [vmem:[%s12 + $0x80] sm:$0xf]
    %v1544 = vld [vmem:[%s12 + $0x84] sm:$0xf]
    %v1545 = vld [vmem:[%s12 + $0x88] sm:$0xf]
    %v1546 = vld [vmem:[%s12 + $0x8c] sm:$0xf]
    %v1547 = vld [vmem:[%s13] sm:$0x1]
    %v1549 = vlaneseq
    %v1550 = vshrl.u32 %v1549, 7
    %v1551 = vsub.s32 0, %v1550
    %v1552 = vrot.slane %v1547, %v1551
    %v1590 = vunpack.c.l.b16 %v1511
    %v1591 = vunpack.c.l.b16 %v1512
    %v1592 = vunpack.c.l.b16 %v1513
    %v1593 = vunpack.c.l.b16 %v1514
    %v1594 = vunpack.c.l.b16 %v1515
    %v1595 = vunpack.c.l.b16 %v1516
    %v1596 = vunpack.c.l.b16 %v1517
    %v1597 = vunpack.c.l.b16 %v1518
    %v1598 = vunpack.c.l.b16 %v1519
    %v1599 = vunpack.c.l.b16 %v1520
    %v1600 = vunpack.c.l.b16 %v1521
    %v1601 = vunpack.c.l.b16 %v1522
    %v1602 = vunpack.c.l.b16 %v1523
    %v1603 = vunpack.c.l.b16 %v1524
    %v1604 = vunpack.c.l.b16 %v1525
    %v1605 = vunpack.c.l.b16 %v1526
    %v1606 = vunpack.c.l.b16 %v1527
    %v1607 = vunpack.c.l.b16 %v1528
    %v1608 = vunpack.c.l.b16 %v1529
    %v1609 = vunpack.c.l.b16 %v1530
    %v1610 = vunpack.c.l.b16 %v1531
    %v1611 = vunpack.c.l.b16 %v1532
    %v1612 = vunpack.c.l.b16 %v1533
    %v1613 = vunpack.c.l.b16 %v1534
    %v1614 = vunpack.c.l.b16 %v1535
    %v1615 = vunpack.c.l.b16 %v1536
    %v1616 = vunpack.c.l.b16 %v1537
    %v1617 = vunpack.c.l.b16 %v1538
    %v1618 = vunpack.c.l.b16 %v1539
    %v1619 = vunpack.c.l.b16 %v1540
    %v1620 = vunpack.c.l.b16 %v1541
    %v1621 = vunpack.c.l.b16 %v1542
    %v1622 = vunpack.c.l.b16 %v1543
    %v1623 = vunpack.c.l.b16 %v1544
    %v1624 = vunpack.c.l.b16 %v1545
    %v1625 = vunpack.c.l.b16 %v1546
    %v1626 = vpack.c.b16 %v1591, %v1590
    %v1627 = vpack.c.b16 %v1593, %v1592
    %v1628 = vpack.c.b16 %v1595, %v1594
    %v1629 = vpack.c.b16 %v1597, %v1596
    %v1630 = vpack.c.b16 %v1599, %v1598
    %v1631 = vpack.c.b16 %v1601, %v1600
    %v1632 = vpack.c.b16 %v1603, %v1602
    %v1633 = vpack.c.b16 %v1605, %v1604
    %v1634 = vpack.c.b16 %v1607, %v1606
    %v1635 = vpack.c.b16 %v1609, %v1608
    %v1636 = vpack.c.b16 %v1611, %v1610
    %v1637 = vpack.c.b16 %v1613, %v1612
    %v1638 = vpack.c.b16 %v1615, %v1614
    %v1639 = vpack.c.b16 %v1617, %v1616
    %v1640 = vpack.c.b16 %v1619, %v1618
    %v1641 = vpack.c.b16 %v1621, %v1620
    %v1642 = vpack.c.b16 %v1623, %v1622
    %v1643 = vpack.c.b16 %v1625, %v1624
    %v1663 = vsel %vm393, %v1489, 0
    %v1666 = vsel %vm393, %v1492, 0
    %v1669 = vsel %vm393, %v1495, 0
    %v1672 = vsel %vm393, %v1498, 0
    %v1675 = vsel %vm393, %v1501, 0
    %v1678 = vsel %vm393, %v1504, 0
    %v1681 = vsel %vm393, %v1507, 0
    %v1684 = vsel %vm393, %v1510, 0
    %1686 = vmatprep.subr.bf16.mxu0 0
    %1687 = vmatpush1.bf16.msra.mxu0 %v1626
    %1688 = vmatprep.subr.bf16.mxu0 0
    %1689 = vmatpush1.bf16.msra.mxu0 %v1627
    %1690 = vmatprep.subr.bf16.mxu0 0
    %1691 = vmatpush1.bf16.msra.mxu0 %v1628
    %1692 = vmatprep.subr.bf16.mxu0 0
    %1693 = vmatpush1.bf16.msra.mxu0 %v1629
    %1694 = vmatprep.subr.bf16.mxu0 0
    %1695 = vmatpush1.bf16.msra.mxu0 %v1630
    %1696 = vmatprep.subr.bf16.mxu0 0
    %1697 = vmatpush1.bf16.msra.mxu0 %v1631
    %1698 = vmatprep.subr.bf16.mxu0 0
    %1699 = vmatpush1.bf16.msra.mxu0 %v1632
    %1700 = vmatprep.subr.bf16.mxu0 0
    %1701 = vmatpush1.bf16.msra.mxu0 %v1633
    %1702 = vmatprep.subr.bf16.mxu0 0
    %1703 = vmatpush1.bf16.msra.mxu0 %v1634
    %1704 = vmatprep.subr.bf16.mxu0 0
    %1705 = vmatpush1.bf16.msra.mxu0 %v1635
    %1706 = vmatprep.subr.bf16.mxu0 0
    %1707 = vmatpush1.bf16.msra.mxu0 %v1636
    %1708 = vmatprep.subr.bf16.mxu0 0
    %1709 = vmatpush1.bf16.msra.mxu0 %v1637
    %1710 = vmatprep.subr.bf16.mxu0 0
    %1711 = vmatpush1.bf16.msra.mxu0 %v1638
    %1712 = vmatprep.subr.bf16.mxu0 0
    %1713 = vmatpush1.bf16.msra.mxu0 %v1639
    %1714 = vmatprep.subr.bf16.mxu0 0
    %1715 = vmatpush1.bf16.msra.mxu0 %v1640
    %1716 = vmatprep.subr.bf16.mxu0 0
    %1717 = vmatpush1.bf16.msra.mxu0 %v1641
    %1718 = vmatprep.mubr.bf16.mxu0 %v1488
    %1719 = vmatmul.mubr.bf16.gmra.mrb[0].mxu0 %v1487
    %v1720 = vpop.f32.mrb[0].mxu0
    %v1721 = vadd.f32 %v1552, %v1720
    %v1722 = vpop.f32.mrb[0].mxu0
    %v1723 = vpop.f32.mrb[0].mxu0
    %v1724 = vadd.f32 %v1552, %v1723
    %v1725 = vpop.f32.mrb[0].mxu0
    %1726 = vmatprep.mubr.bf16.mxu0 %v1491
    %1727 = vmatmul.mubr.bf16.gmra.mrb[0].mxu0 %v1490
    %v1728 = vpop.f32.mrb[0].mxu0
    %v1729 = vadd.f32 %v1552, %v1728
    %v1730 = vpop.f32.mrb[0].mxu0
    %v1731 = vpop.f32.mrb[0].mxu0
    %v1732 = vadd.f32 %v1552, %v1731
    %v1733 = vpop.f32.mrb[0].mxu0
    %1734 = vmatprep.mubr.bf16.mxu0 %v1494
    %1735 = vmatmul.mubr.bf16.gmra.mrb[0].mxu0 %v1493
    %v1736 = vpop.f32.mrb[0].mxu0
    %v1737 = vadd.f32 %v1552, %v1736
    %v1738 = vpop.f32.mrb[0].mxu0
    %v1739 = vpop.f32.mrb[0].mxu0
    %v1740 = vadd.f32 %v1552, %v1739
    %v1741 = vpop.f32.mrb[0].mxu0
    %1742 = vmatprep.mubr.bf16.mxu0 %v1497
    %1743 = vmatmul.mubr.bf16.gmra.mrb[0].mxu0 %v1496
    %v1744 = vpop.f32.mrb[0].mxu0
    %v1745 = vadd.f32 %v1552, %v1744
    %v1746 = vpop.f32.mrb[0].mxu0
    %v1747 = vpop.f32.mrb[0].mxu0
    %v1748 = vadd.f32 %v1552, %v1747
    %v1749 = vpop.f32.mrb[0].mxu0
    %1750 = vmatprep.mubr.bf16.mxu0 %v1500
    %1751 = vmatmul.mubr.bf16.gmra.mrb[0].mxu0 %v1499
    %v1752 = vpop.f32.mrb[0].mxu0
    %v1753 = vadd.f32 %v1552, %v1752
    %v1754 = vpop.f32.mrb[0].mxu0
    %v1755 = vpop.f32.mrb[0].mxu0
    %v1756 = vadd.f32 %v1552, %v1755
    %v1757 = vpop.f32.mrb[0].mxu0
    %1758 = vmatprep.mubr.bf16.mxu0 %v1503
    %1759 = vmatmul.mubr.bf16.gmra.mrb[0].mxu0 %v1502
    %v1760 = vpop.f32.mrb[0].mxu0
    %v1761 = vadd.f32 %v1552, %v1760
    %v1762 = vpop.f32.mrb[0].mxu0
    %v1763 = vpop.f32.mrb[0].mxu0
    %v1764 = vadd.f32 %v1552, %v1763
    %v1765 = vpop.f32.mrb[0].mxu0
    %1766 = vmatprep.mubr.bf16.mxu0 %v1506
    %1767 = vmatmul.mubr.bf16.gmra.mrb[0].mxu0 %v1505
    %v1768 = vpop.f32.mrb[0].mxu0
    %v1769 = vadd.f32 %v1552, %v1768
    %v1770 = vpop.f32.mrb[0].mxu0
    %v1771 = vpop.f32.mrb[0].mxu0
    %v1772 = vadd.f32 %v1552, %v1771
    %v1773 = vpop.f32.mrb[0].mxu0
    %1774 = vmatprep.mubr.bf16.mxu0 %v1509
    %1775 = vmatmul.mubr.bf16.gmra.mrb[0].mxu0 %v1508
    %v1776 = vpop.f32.mrb[0].mxu0
    %v1777 = vadd.f32 %v1552, %v1776
    %v1778 = vpop.f32.mrb[0].mxu0
    %v1779 = vpop.f32.mrb[0].mxu0
    %v1780 = vadd.f32 %v1552, %v1779
    %v1781 = vpop.f32.mrb[0].mxu0
    %1782 = vdwg.mxu0
    %1783 = vmatprep.subr.bf16.mxu0 0
    %1784 = vmatpush1.bf16.msra.mxu0 %v1642
    %1785 = vmatprep.subr.bf16.mxu0 0
    %1786 = vmatpush1.bf16.msra.mxu0 %v1643
    %1787 = vmatprep.subr.bf16.mxu0 0
    %1788 = vmatpush1.bf16.msra.mxu0 0
    %1789 = vmatprep.subr.bf16.mxu0 0
    %1790 = vmatpush1.bf16.msra.mxu0 0
    %1791 = vmatprep.subr.bf16.mxu0 0
    %1792 = vmatpush1.bf16.msra.mxu0 0
    %1793 = vmatprep.subr.bf16.mxu0 0
    %1794 = vmatpush1.bf16.msra.mxu0 0
    %1795 = vmatprep.subr.bf16.mxu0 0
    %1796 = vmatpush1.bf16.msra.mxu0 0
    %1797 = vmatprep.subr.bf16.mxu0 0
    %1798 = vmatpush1.bf16.msra.mxu0 0
    %1799 = vmatprep.subr.bf16.mxu0 0
    %1800 = vmatpush1.bf16.msra.mxu0 0
    %1801 = vmatprep.subr.bf16.mxu0 0
    %1802 = vmatpush1.bf16.msra.mxu0 0
    %1803 = vmatprep.subr.bf16.mxu0 0
    %1804 = vmatpush1.bf16.msra.mxu0 0
    %1805 = vmatprep.subr.bf16.mxu0 0
    %1806 = vmatpush1.bf16.msra.mxu0 0
    %1807 = vmatprep.subr.bf16.mxu0 0
    %1808 = vmatpush1.bf16.msra.mxu0 0
    %1809 = vmatprep.subr.bf16.mxu0 0
    %1810 = vmatpush1.bf16.msra.mxu0 0
    %1811 = vmatprep.subr.bf16.mxu0 0
    %1812 = vmatpush1.bf16.msra.mxu0 0
    %1813 = vmatprep.subr.bf16.mxu0 0
    %1814 = vmatpush1.bf16.msra.mxu0 0
    %1815 = vmatprep.mubr.bf16.mxu0 0
    %1816 = vmatmul.mubr.bf16.gmra.mrb[0].mxu0 %v1663
    %v1817 = vpop.f32.mrb[0].mxu0
    %v1818 = vadd.f32 %v1721, %v1817
    %v1819 = vpop.f32.mrb[0].mxu0
    %v1820 = vpop.f32.mrb[0].mxu0
    %v1821 = vadd.f32 %v1724, %v1820
    %v1822 = vpop.f32.mrb[0].mxu0
    %1823 = vmatprep.mubr.bf16.mxu0 0
    %1824 = vmatmul.mubr.bf16.gmra.mrb[0].mxu0 %v1666
    %v1825 = vpop.f32.mrb[0].mxu0
    %v1826 = vadd.f32 %v1729, %v1825
    %v1827 = vpop.f32.mrb[0].mxu0
    %v1828 = vpop.f32.mrb[0].mxu0
    %v1829 = vadd.f32 %v1732, %v1828
    %v1830 = vpop.f32.mrb[0].mxu0
    %1831 = vmatprep.mubr.bf16.mxu0 0
    %1832 = vmatmul.mubr.bf16.gmra.mrb[0].mxu0 %v1669
    %v1833 = vpop.f32.mrb[0].mxu0
    %v1834 = vadd.f32 %v1737, %v1833
    %v1835 = vpop.f32.mrb[0].mxu0
    %v1836 = vpop.f32.mrb[0].mxu0
    %v1837 = vadd.f32 %v1740, %v1836
    %v1838 = vpop.f32.mrb[0].mxu0
    %1839 = vmatprep.mubr.bf16.mxu0 0
    %1840 = vmatmul.mubr.bf16.gmra.mrb[0].mxu0 %v1672
    %v1841 = vpop.f32.mrb[0].mxu0
    %v1842 = vadd.f32 %v1745, %v1841
    %v1843 = vpop.f32.mrb[0].mxu0
    %v1844 = vpop.f32.mrb[0].mxu0
    %v1845 = vadd.f32 %v1748, %v1844
    %v1846 = vpop.f32.mrb[0].mxu0
    %1847 = vmatprep.mubr.bf16.mxu0 0
    %1848 = vmatmul.mubr.bf16.gmra.mrb[0].mxu0 %v1675
    %v1849 = vpop.f32.mrb[0].mxu0
    %v1850 = vadd.f32 %v1753, %v1849
    %v1851 = vpop.f32.mrb[0].mxu0
    %v1852 = vpop.f32.mrb[0].mxu0
    %v1853 = vadd.f32 %v1756, %v1852
    %v1854 = vpop.f32.mrb[0].mxu0
    %1855 = vmatprep.mubr.bf16.mxu0 0
    %1856 = vmatmul.mubr.bf16.gmra.mrb[0].mxu0 %v1678
    %v1857 = vpop.f32.mrb[0].mxu0
    %v1858 = vadd.f32 %v1761, %v1857
    %v1859 = vpop.f32.mrb[0].mxu0
    %v1860 = vpop.f32.mrb[0].mxu0
    %v1861 = vadd.f32 %v1764, %v1860
    %v1862 = vpop.f32.mrb[0].mxu0
    %1863 = vmatprep.mubr.bf16.mxu0 0
    %1864 = vmatmul.mubr.bf16.gmra.mrb[0].mxu0 %v1681
    %v1865 = vpop.f32.mrb[0].mxu0
    %v1866 = vadd.f32 %v1769, %v1865
    %v1867 = vpop.f32.mrb[0].mxu0
    %v1868 = vpop.f32.mrb[0].mxu0
    %v1869 = vadd.f32 %v1772, %v1868
    %v1870 = vpop.f32.mrb[0].mxu0
    %1871 = vmatprep.mubr.bf16.mxu0 0
    %1872 = vmatmul.mubr.bf16.gmra.mrb[0].mxu0 %v1684
    %v1873 = vpop.f32.mrb[0].mxu0
    %v1874 = vadd.f32 %v1777, %v1873
    %v1875 = vpop.f32.mrb[0].mxu0
    %v1876 = vpop.f32.mrb[0].mxu0
    %v1877 = vadd.f32 %v1780, %v1876
    %v1878 = vpop.f32.mrb[0].mxu0
    %1879 = vdwg.mxu0
    %v1880 = vmax.f32 %v1818, 0.0
    %v1881 = vmax.f32 %v1821, 0.0
    %v1882 = vmax.f32 %v1826, 0.0
    %v1883 = vmax.f32 %v1829, 0.0
    %v1884 = vmax.f32 %v1834, 0.0
    %v1885 = vmax.f32 %v1837, 0.0
    %v1886 = vmax.f32 %v1842, 0.0
    %v1887 = vmax.f32 %v1845, 0.0
    %v1888 = vmax.f32 %v1850, 0.0
    %v1889 = vmax.f32 %v1853, 0.0
    %v1890 = vmax.f32 %v1858, 0.0
    %v1891 = vmax.f32 %v1861, 0.0
    %v1892 = vmax.f32 %v1866, 0.0
    %v1893 = vmax.f32 %v1869, 0.0
    %v1894 = vmax.f32 %v1874, 0.0
    %v1895 = vmax.f32 %v1877, 0.0
    %v1896 = vlaneseq
    %v1897 = vshrl.u32 %v1896, 7
    %v1898 = vsub.s32 0, %v1897
    %v1899 = vrot.slane %v941, %v1898
    %v1900 = vlaneseq
    %v1901 = vshrl.u32 %v1900, 7
    %v1902 = vsub.s32 0, %v1901
    %v1903 = vrot.slane %v943, %v1902
    %v1904 = vmul.f32 %v1880, %v1899
    %v1905 = vmul.f32 %v1881, %v1899
    %v1906 = vmul.f32 %v1882, %v1899
    %v1907 = vmul.f32 %v1883, %v1899
    %v1908 = vmul.f32 %v1884, %v1899
    %v1909 = vmul.f32 %v1885, %v1899
    %v1910 = vmul.f32 %v1886, %v1899
    %v1911 = vmul.f32 %v1887, %v1899
    %v1912 = vmul.f32 %v1888, %v1903
    %v1913 = vmul.f32 %v1889, %v1903
    %v1914 = vmul.f32 %v1890, %v1903
    %v1915 = vmul.f32 %v1891, %v1903
    %v1916 = vmul.f32 %v1892, %v1903
    %v1917 = vmul.f32 %v1893, %v1903
    %v1918 = vmul.f32 %v1894, %v1903
    %v1919 = vmul.f32 %v1895, %v1903
    %v1920 = vmul.f32 %v1904, %v738
    %v1921 = vmul.f32 %v1905, %v740
    %v1922 = vmul.f32 %v1906, %v742
    %v1923 = vmul.f32 %v1907, %v744
    %v1924 = vmul.f32 %v1908, %v746
    %v1925 = vmul.f32 %v1909, %v748
    %v1926 = vmul.f32 %v1910, %v750
    %v1927 = vmul.f32 %v1911, %v752
    %v1928 = vmul.f32 %v1912, %v754
    %v1929 = vmul.f32 %v1913, %v756
    %v1930 = vmul.f32 %v1914, %v758
    %v1931 = vmul.f32 %v1915, %v760
    %v1932 = vmul.f32 %v1916, %v762
    %v1933 = vmul.f32 %v1917, %v764
    %v1934 = vmul.f32 %v1918, %v766
    %v1935 = vmul.f32 %v1919, %v768
    %1936 = vxpose.xlu0.b32.start [1/16] %v1920, 128
    %1937 = vxpose.xlu0.b32.cont [2/16] %v1921, 128
    %1938 = vxpose.xlu0.b32.cont [3/16] %v1922, 128
    %1939 = vxpose.xlu0.b32.cont [4/16] %v1923, 128
    %1940 = vxpose.xlu0.b32.cont [5/16] %v1924, 128
    %1941 = vxpose.xlu0.b32.cont [6/16] %v1925, 128
    %1942 = vxpose.xlu0.b32.cont [7/16] %v1926, 128
    %1943 = vxpose.xlu0.b32.cont [8/16] %v1927, 128
    %1944 = vxpose.xlu0.b32.cont [9/16] %v1928, 128
    %1945 = vxpose.xlu0.b32.cont [10/16] %v1929, 128
    %1946 = vxpose.xlu0.b32.cont [11/16] %v1930, 128
    %1947 = vxpose.xlu0.b32.cont [12/16] %v1931, 128
    %1948 = vxpose.xlu0.b32.cont [13/16] %v1932, 128
    %1949 = vxpose.xlu0.b32.cont [14/16] %v1933, 128
    %1950 = vxpose.xlu0.b32.cont [15/16] %v1934, 128
    %1951 = vxpose.xlu0.b32.end [16/16] %v1935, 128
    %v1952 = vpop.trf.xlu0
    %v1953 = vpop.trf.xlu0
    %v1954 = vpop.trf.xlu0
    %v1955 = vpop.trf.xlu0
    %v1956 = vpop.trf.xlu0
    %v1957 = vpop.trf.xlu0
    %v1958 = vpop.trf.xlu0
    %v1959 = vpop.trf.xlu0
    %v1960 = vpop.trf.xlu0
    %v1961 = vpop.trf.xlu0
    %v1962 = vpop.trf.xlu0
    %v1963 = vpop.trf.xlu0
    %v1964 = vpop.trf.xlu0
    %v1965 = vpop.trf.xlu0
    %v1966 = vpop.trf.xlu0
    %v1967 = vpop.trf.xlu0
    %1968 = vst [vmem:[#allocation2] sm:$0xff] %v1952
    %1969 = vst [vmem:[#allocation2 + $0x8] sm:$0xff] %v1953
    %1970 = vst [vmem:[#allocation2 + $0x10] sm:$0xff] %v1954
    %1971 = vst [vmem:[#allocation2 + $0x18] sm:$0xff] %v1955
    // Predicated region
    $region58: #{tpu_custom_call.1} parent=1 // pred_check
      _
    $region59: #{tpu_custom_call.1} parent=1 // pred_check_branch
      %1973 = sbr.rel (0) target = $region61
    $region60: #{tpu_custom_call.1} parent=1 // pred_region
      %s1975 = ssub.s32 512, 512
      %1976 = vsyncadd [#allocation3], %s1975
      %s1977 = sshll.u32 [#allocation2], 4
      %s1978 = int_to_ptr.vmem [resolvable:$true] %s1977
      %1983 = dma.vmem_to_hbm [thread:$0]  %s1978, 512, %s14, [#allocation3], 128, 128, 8
    $region61: #{tpu_custom_call.1} parent=1 // pred_fallthru
      _
    // Predicated region
    $region62: #{tpu_custom_call.1} parent=1 // pred_check
      _
    $region63: #{tpu_custom_call.1} parent=1 // pred_check_branch
      %1985 = sbr.rel (0) target = $region65
    $region64: #{tpu_custom_call.1} parent=1 // pred_region
      %1986 = dma.done [#allocation3], 512
    $region65: #{tpu_custom_call.1} parent=1 // pred_fallthru
      _
    %1987 = vsyncpa [#allocation3], 1

</llo_original>
